<compile_context>
chip_gen: v7x
topology: tpu7x:2x2x1
jax: 0.10.0
libtpu: 0.0.40
codegen_flags: <defaults>
</compile_context>

<pallas_src>
import math
import functools

import jax
import jax.numpy as jnp
from jax.experimental import pallas as pl
from jax.experimental.pallas import tpu as pltpu


def _vmem_limit_bytes():
    """Generation-aware scoped-VMEM budget (review item: set it explicitly)."""
    cap = 128 * 1024 * 1024
    try:
        info = pltpu.get_tpu_info()
        cap = getattr(info, "vmem_capacity_bytes", cap) or cap
    except Exception:
        pass
    # ~100 MiB on v5e/v6e (128 MiB physical), ~54 MiB on v7x (64 MiB physical).
    return min(int(0.85 * cap), 100 * 1024 * 1024)


def _mha_kernel(x_ref, wq_ref, wkv_ref, wo_ref, bq_ref, bkv_ref, bo_ref,
                o_ref, ctx_ref, *, d_k, heads_per_step, q_block, scale, approx_recip):
    qi = pl.program_id(1)
    hg = pl.program_id(2)
    G = heads_per_step
    cdt = x_ref.dtype                                            # MXU dtype (bf16)

    x_kv = x_ref[0]                                              # (S, D), resident per batch
    q_start = pl.multiple_of(qi * q_block, q_block)
    x_q = x_ref[0, pl.ds(q_start, q_block), :]                   # (Tq, D) query tile

    # Fused per-group projections: one MXU push each, f32 accumulation.
    q_all = jnp.dot(x_q, wq_ref[0],
                    preferred_element_type=jnp.float32) + bq_ref[0]       # (Tq, G*d_k)
    kv_all = jnp.dot(x_kv, wkv_ref[0],
                     preferred_element_type=jnp.float32) + bkv_ref[0]     # (S, 2*G*d_k)

    ctx_cols = []
    for g in range(G):                      # static unroll over heads in this group
        # Scale q once (Tq*d_k elems) instead of the (Tq, S) score matrix.
        q = (q_all[:, g * d_k:(g + 1) * d_k] * scale).astype(cdt)         # (Tq, d_k)
        k = kv_all[:, 2 * g * d_k: 2 * g * d_k + d_k].astype(cdt)         # (S, d_k)
        v = kv_all[:, 2 * g * d_k + d_k: 2 * (g + 1) * d_k].astype(cdt)   # (S, d_k)

        # Scores: contract on d_k directly (no explicit k.T materialization).
        # TODO(synk): check the Mosaic dump that this does not lower to per-tile vxpose
        #             of k competing with vmatmul pushes on the extended slot.
        s = jax.lax.dot_general(q, k, (((1,), (1,)), ((), ())),
                                preferred_element_type=jnp.float32)       # (Tq, S) f32

        # Numerically stable softmax, all f32; reductions stay on the lane axis.
        s = s - jnp.max(s, axis=-1, keepdims=True)
        p = jnp.exp(s)
        denom = jnp.sum(p, axis=-1, keepdims=True)
        if approx_recip:
            p = p * pl.reciprocal(denom, approx=True)
        else:
            p = p / denom

        ctx_cols.append(jnp.dot(p.astype(cdt), v,
                                preferred_element_type=jnp.float32).astype(cdt))

    # Write this group's context into its column slice of the (Tq, D) bf16 scratch
    # (replaces the old f32 accumulator read-modify-write per head).
    ctx_grp = ctx_cols[0] if G == 1 else jnp.concatenate(ctx_cols, axis=-1)
    col0 = pl.multiple_of(hg * (G * d_k), G * d_k)
    ctx_ref[:, pl.ds(col0, G * d_k)] = ctx_grp

    @pl.when(hg == pl.num_programs(2) - 1)
    def _finalize():
        # Single full-depth out-projection (K = D on the MXU) + bias, then store.
        out = jnp.dot(ctx_ref[...], wo_ref[...],
                      preferred_element_type=jnp.float32) + bo_ref[...]   # (Tq, D) f32
        o_ref[0] = out.astype(o_ref.dtype)


def multi_head_attention(x, params, *, n_head, matmul_dtype=jnp.bfloat16,
                         q_block=256, heads_per_step=None, out_dtype=None,
                         approx_recip=True):
    """x: (B, S, D). params: weights stored (D_in, D_out) so y = x @ W + b
    (equivalent to nn.Linear with W = W_pt.T). mask=None path only."""
    B, S, D = x.shape
    assert D % n_head == 0
    d_k = D // n_head

    # Head grouping: target >=256-wide K/V projection width on the v6e/v7x MXU.
    if heads_per_step is None:
        heads_per_step = max(1, min(n_head, 128 // max(d_k, 1)))
    while n_head % heads_per_step:
        heads_per_step -= 1
    G = heads_per_step
    HG = n_head // G

    # Query tiling: bounds the (Tq, S) softmax intermediates and adds a parallel axis.
    Tq = q_block if (S > q_block and S % q_block == 0) else S
    n_q = S // Tq

    wq, wk, wv, wo = params["wq"], params["wk"], params["wv"], params["wo"]
    bq, bk, bv, bo = (params[n].reshape(-1) for n in ("bq", "bk", "bv", "bo"))

    # --- head-major weight packing (one-time XLA layout plumbing) ------------------
    def grouped(w):                                   # (D, D) -> (HG, D, G*d_k)
        return (w.reshape(D, HG, G, d_k).transpose(1, 0, 2, 3)
                 .reshape(HG, D, G * d_k))

    wq_p = grouped(wq).astype(matmul_dtype)                                 # (HG, D, G*d_k)
    wkv_p = (jnp.stack([wk.reshape(D, HG, G, d_k),
                        wv.reshape(D, HG, G, d_k)], axis=3)                 # (D, HG, G, 2, d_k)
             .transpose(1, 0, 2, 3, 4)
             .reshape(HG, D, 2 * G * d_k)).astype(matmul_dtype)             # per head [Wk|Wv]
    wo_p = wo.astype(matmul_dtype)                                          # (D, D), resident

    bq_p = bq.reshape(HG, 1, G * d_k).astype(jnp.float32)
    bkv_p = (jnp.stack([bk.reshape(HG, G, d_k),
                        bv.reshape(HG, G, d_k)], axis=2)
             .reshape(HG, 1, 2 * G * d_k)).astype(jnp.float32)
    bo_p = bo.reshape(1, D).astype(jnp.float32)
    x_m = x.astype(matmul_dtype)                                            # bf16 halves x DMA

    kernel = functools.partial(
        _mha_kernel, d_k=d_k, heads_per_step=G, q_block=Tq,
        scale=1.0 / math.sqrt(d_k), approx_recip=approx_recip)

    return pl.pallas_call(
        kernel,
        out_shape=jax.ShapeDtypeStruct((B, S, D), out_dtype or x.dtype),
        grid_spec=pltpu.PrefetchScalarGridSpec(
            num_scalar_prefetch=0,
            grid=(B, n_q, HG),             # batch x query-tile (parallel) x head-group
            in_specs=[
                pl.BlockSpec((1, S, D), lambda b, qi, hg: (b, 0, 0)),          # x (resident/b)
                # Optional: pipeline_mode=pl.Buffered(3) on the two weight specs if
                # profiling shows exposed DMA at short S / large D.
                pl.BlockSpec((1, D, G * d_k), lambda b, qi, hg: (hg, 0, 0)),   # Wq group
                pl.BlockSpec((1, D, 2 * G * d_k), lambda b, qi, hg: (hg, 0, 0)),  # [Wk|Wv] group
                pl.BlockSpec((D, D), lambda b, qi, hg: (0, 0)),                # Wo (resident)
                pl.BlockSpec((1, 1, G * d_k), lambda b, qi, hg: (hg, 0, 0)),   # bq group
                pl.BlockSpec((1, 1, 2 * G * d_k), lambda b, qi, hg: (hg, 0, 0)),  # [bk|bv] group
                pl.BlockSpec((1, D), lambda b, qi, hg: (0, 0)),                # bo (resident)
            ],
            out_specs=pl.BlockSpec((1, Tq, D), lambda b, qi, hg: (b, qi, 0)),
            scratch_shapes=[pltpu.VMEM((Tq, D), matmul_dtype)],               # ctx columns
        ),
        compiler_params=pltpu.CompilerParams(
            dimension_semantics=("parallel", "parallel", "arbitrary"),
            vmem_limit_bytes=_vmem_limit_bytes(),
        ),
    )(x_m, wq_p, wkv_p, wo_p, bq_p, bkv_p, bo_p)


def init_params(key, d_model):
    """Deterministic parameter init (synthetic, no checkpoint load)."""
    ks = jax.random.split(key, 8)
    bound = 1.0 / math.sqrt(d_model)  # matches nn.Linear default uniform bound
    def w(k):
        return jax.random.uniform(k, (d_model, d_model), jnp.float32, -bound, bound)
    def b(k):
        return jax.random.uniform(k, (1, d_model), jnp.float32, -bound, bound)
    return {
        "wq": w(ks[0]), "wk": w(ks[1]), "wv": w(ks[2]), "wo": w(ks[3]),
        "bq": b(ks[4]), "bk": b(ks[5]), "bv": b(ks[6]), "bo": b(ks[7]),
    }


def _mha_reference(x, params, *, n_head):
    """Pure-JAX reference of the PyTorch module's forward (mask=None)."""
    B, S, D = x.shape
    d_k = D // n_head
    q = x @ params["wq"] + params["bq"]
    k = x @ params["wk"] + params["bk"]
    v = x @ params["wv"] + params["bv"]
    def split(t):
        return t.reshape(B, S, n_head, d_k).transpose(0, 2, 1, 3)
    q, k, v = split(q), split(k), split(v)
    s = jnp.einsum("bhqd,bhkd->bhqk", q, k) / math.sqrt(d_k)
    p = jax.nn.softmax(s, axis=-1)
    ctx = jnp.einsum("bhqk,bhkd->bhqd", p, v)
    ctx = ctx.transpose(0, 2, 1, 3).reshape(B, S, D)
    return ctx @ params["wo"] + params["bo"]


if __name__ == "__main__":
    key = jax.random.PRNGKey(0)
    k_x, k_p = jax.random.split(key)

    # Small but lane-dense shapes (D multiple of 128, d_k = 64) so layouts are
    # representative of production rather than masked partial-vector ops.
    B, S, D, H = 2, 128, 256, 4
    x = jax.random.normal(k_x, (B, S, D), jnp.float32)
    params = init_params(k_p, D)

    out = multi_head_attention(x, params, n_head=H)
    jax.block_until_ready(out)
    assert out.shape == (B, S, D) and out.dtype == jnp.float32

    # Loose tolerance: bf16 MXU inputs + approx reciprocal vs. the f32 reference.
    ref = _mha_reference(x, params, n_head=H)
    err = float(jnp.max(jnp.abs(out - ref)))
    assert err < 5e-2, f"max abs error {err}"
    print("KERNEL_OK")
</pallas_src>

<mosaic_0001>
module attributes {stable_mosaic.version = 11 : i64} {
  func.func @_mha_kernel(%arg0: i32, %arg1: i32, %arg2: i32, %arg3: memref<1x128x256xbf16, #tpu.memory_space<vmem>>, %arg4: memref<1x256x128xbf16, #tpu.memory_space<vmem>>, %arg5: memref<1x256x256xbf16, #tpu.memory_space<vmem>>, %arg6: memref<256x256xbf16, #tpu.memory_space<vmem>>, %arg7: memref<1x1x128xf32, #tpu.memory_space<vmem>>, %arg8: memref<1x1x256xf32, #tpu.memory_space<vmem>>, %arg9: memref<1x256xf32, #tpu.memory_space<vmem>>, %arg10: memref<1x128x256xf32, #tpu.memory_space<vmem>>, %arg11: memref<128x256xbf16, #tpu.memory_space<vmem>>) attributes {dimension_semantics = [#tpu.dimension_semantics<parallel>, #tpu.dimension_semantics<parallel>, #tpu.dimension_semantics<arbitrary>], iteration_bounds = array<i64: 2, 1, 2>, scalar_prefetch = 0 : i64, scratch_operands = 1 : i64, tpu.core_type = #tpu.core_type<tc>, window_params = [{transform_indices = @transform_0, window_bounds = array<i64: 1, 128, 256>}, {transform_indices = @transform_1, window_bounds = array<i64: 1, 256, 128>}, {transform_indices = @transform_2, window_bounds = array<i64: 1, 256, 256>}, {pipeline_mode = #tpu.pipeline_mode<synchronous>, transform_indices = @transform_3, window_bounds = array<i64: 256, 256>}, {transform_indices = @transform_4, window_bounds = array<i64: 1, 1, 128>}, {transform_indices = @transform_5, window_bounds = array<i64: 1, 1, 256>}, {pipeline_mode = #tpu.pipeline_mode<synchronous>, transform_indices = @transform_6, window_bounds = array<i64: 1, 256>}, {transform_indices = @transform_7, window_bounds = array<i64: 1, 128, 256>}]} {
    %c0 = arith.constant 0 : index
    %c0_0 = arith.constant 0 : index
    %c0_1 = arith.constant 0 : index
    %0 = vector.load %arg3[%c0, %c0_0, %c0_1] : memref<1x128x256xbf16, #tpu.memory_space<vmem>>, vector<1x128x256xbf16>
    %1 = vector.shape_cast %0 : vector<1x128x256xbf16> to vector<128x256xbf16>
    %c128_i32 = arith.constant 128 : i32
    %2 = arith.muli %arg1, %c128_i32 : i32
    %3 = tpu.assume_multiple %2, 128 : i32
    %c0_2 = arith.constant 0 : index
    %4 = arith.index_cast %3 : i32 to index
    %c0_3 = arith.constant 0 : index
    %5 = vector.load %arg3[%c0_2, %4, %c0_3] : memref<1x128x256xbf16, #tpu.memory_space<vmem>>, vector<1x128x256xbf16>
    %6 = vector.shape_cast %5 : vector<1x128x256xbf16> to vector<128x256xbf16>
    %c0_4 = arith.constant 0 : index
    %c0_5 = arith.constant 0 : index
    %c0_6 = arith.constant 0 : index
    %7 = vector.load %arg4[%c0_4, %c0_5, %c0_6] : memref<1x256x128xbf16, #tpu.memory_space<vmem>>, vector<1x256x128xbf16>
    %8 = vector.shape_cast %7 : vector<1x256x128xbf16> to vector<256x128xbf16>
    %cst = arith.constant dense<0.000000e+00> : vector<128x128xf32>
    %9 = tpu.matmul %6, %8, %cst {dimension_numbers = #tpu.dot_dimension_numbers<[1], [0], [0], [1], [0, 0, 1, 1], [], []>} : vector<128x256xbf16>, vector<256x128xbf16>, vector<128x128xf32> -> vector<128x128xf32>
    %c0_7 = arith.constant 0 : index
    %c0_8 = arith.constant 0 : index
    %c0_9 = arith.constant 0 : index
    %10 = vector.load %arg7[%c0_7, %c0_8, %c0_9] : memref<1x1x128xf32, #tpu.memory_space<vmem>>, vector<1x1x128xf32>
    %11 = vector.shape_cast %10 : vector<1x1x128xf32> to vector<1x128xf32>
    %12 = vector.broadcast %11 : vector<1x128xf32> to vector<128x128xf32>
    %13 = arith.addf %9, %12 : vector<128x128xf32>
    %c0_10 = arith.constant 0 : index
    %c0_11 = arith.constant 0 : index
    %c0_12 = arith.constant 0 : index
    %14 = vector.load %arg5[%c0_10, %c0_11, %c0_12] : memref<1x256x256xbf16, #tpu.memory_space<vmem>>, vector<1x256x256xbf16>
    %15 = vector.shape_cast %14 : vector<1x256x256xbf16> to vector<256x256xbf16>
    %cst_13 = arith.constant dense<0.000000e+00> : vector<128x256xf32>
    %16 = tpu.matmul %1, %15, %cst_13 {dimension_numbers = #tpu.dot_dimension_numbers<[1], [0], [0], [1], [0, 0, 1, 1], [], []>} : vector<128x256xbf16>, vector<256x256xbf16>, vector<128x256xf32> -> vector<128x256xf32>
    %c0_14 = arith.constant 0 : index
    %c0_15 = arith.constant 0 : index
    %c0_16 = arith.constant 0 : index
    %17 = vector.load %arg8[%c0_14, %c0_15, %c0_16] : memref<1x1x256xf32, #tpu.memory_space<vmem>>, vector<1x1x256xf32>
    %18 = vector.shape_cast %17 : vector<1x1x256xf32> to vector<1x256xf32>
    %19 = vector.broadcast %18 : vector<1x256xf32> to vector<128x256xf32>
    %20 = arith.addf %16, %19 : vector<128x256xf32>
    %21 = vector.extract_strided_slice %13 {offsets = [0, 0], sizes = [128, 64], strides = [1, 1]} : vector<128x128xf32> to vector<128x64xf32>
    %cst_17 = arith.constant 1.250000e-01 : f32
    %22 = vector.broadcast %cst_17 : f32 to vector<128x64xf32>
    %23 = arith.mulf %21, %22 : vector<128x64xf32>
    %24 = arith.truncf %23 : vector<128x64xf32> to vector<128x64xbf16>
    %25 = vector.extract_strided_slice %20 {offsets = [0, 0], sizes = [128, 64], strides = [1, 1]} : vector<128x256xf32> to vector<128x64xf32>
    %26 = arith.truncf %25 : vector<128x64xf32> to vector<128x64xbf16>
    %27 = vector.extract_strided_slice %20 {offsets = [0, 64], sizes = [128, 64], strides = [1, 1]} : vector<128x256xf32> to vector<128x64xf32>
    %28 = arith.truncf %27 : vector<128x64xf32> to vector<128x64xbf16>
    %cst_18 = arith.constant dense<0.000000e+00> : vector<128x128xf32>
    %29 = tpu.matmul %24, %26, %cst_18 {dimension_numbers = #tpu.dot_dimension_numbers<[1], [1], [0], [0], [0, 0, 1, 0], [], []>} : vector<128x64xbf16>, vector<128x64xbf16>, vector<128x128xf32> -> vector<128x128xf32>
    %cst_19 = arith.constant dense<0xFF800000> : vector<128xf32>
    %30 = vector.multi_reduction <maximumf>, %29, %cst_19 [1] : vector<128x128xf32> to vector<128xf32>
    %31 = vector.shape_cast %30 : vector<128xf32> to vector<128x1xf32>
    %32 = vector.broadcast %31 : vector<128x1xf32> to vector<128x128xf32>
    %33 = arith.subf %29, %32 : vector<128x128xf32>
    %34 = math.exp %33 : vector<128x128xf32>
    %cst_20 = arith.constant dense<0.000000e+00> : vector<128xf32>
    %35 = vector.multi_reduction <add>, %34, %cst_20 [1] : vector<128x128xf32> to vector<128xf32>
    %36 = vector.shape_cast %35 : vector<128xf32> to vector<128x1xf32>
    %37 = tpu.reciprocal %36 {approx = true} : vector<128x1xf32> -> vector<128x1xf32>
    %38 = vector.broadcast %37 : vector<128x1xf32> to vector<128x128xf32>
    %39 = arith.mulf %34, %38 : vector<128x128xf32>
    %40 = arith.truncf %39 : vector<128x128xf32> to vector<128x128xbf16>
    %cst_21 = arith.constant dense<0.000000e+00> : vector<128x64xf32>
    %41 = tpu.matmul %40, %28, %cst_21 {dimension_numbers = #tpu.dot_dimension_numbers<[1], [0], [0], [1], [0, 0, 1, 1], [], []>} : vector<128x128xbf16>, vector<128x64xbf16>, vector<128x64xf32> -> vector<128x64xf32>
    %42 = arith.truncf %41 : vector<128x64xf32> to vector<128x64xbf16>
    %43 = vector.extract_strided_slice %13 {offsets = [0, 64], sizes = [128, 64], strides = [1, 1]} : vector<128x128xf32> to vector<128x64xf32>
    %cst_22 = arith.constant 1.250000e-01 : f32
    %44 = vector.broadcast %cst_22 : f32 to vector<128x64xf32>
    %45 = arith.mulf %43, %44 : vector<128x64xf32>
    %46 = arith.truncf %45 : vector<128x64xf32> to vector<128x64xbf16>
    %47 = vector.extract_strided_slice %20 {offsets = [0, 128], sizes = [128, 64], strides = [1, 1]} : vector<128x256xf32> to vector<128x64xf32>
    %48 = arith.truncf %47 : vector<128x64xf32> to vector<128x64xbf16>
    %49 = vector.extract_strided_slice %20 {offsets = [0, 192], sizes = [128, 64], strides = [1, 1]} : vector<128x256xf32> to vector<128x64xf32>
    %50 = arith.truncf %49 : vector<128x64xf32> to vector<128x64xbf16>
    %cst_23 = arith.constant dense<0.000000e+00> : vector<128x128xf32>
    %51 = tpu.matmul %46, %48, %cst_23 {dimension_numbers = #tpu.dot_dimension_numbers<[1], [1], [0], [0], [0, 0, 1, 0], [], []>} : vector<128x64xbf16>, vector<128x64xbf16>, vector<128x128xf32> -> vector<128x128xf32>
    %cst_24 = arith.constant dense<0xFF800000> : vector<128xf32>
    %52 = vector.multi_reduction <maximumf>, %51, %cst_24 [1] : vector<128x128xf32> to vector<128xf32>
    %53 = vector.shape_cast %52 : vector<128xf32> to vector<128x1xf32>
    %54 = vector.broadcast %53 : vector<128x1xf32> to vector<128x128xf32>
    %55 = arith.subf %51, %54 : vector<128x128xf32>
    %56 = math.exp %55 : vector<128x128xf32>
    %cst_25 = arith.constant dense<0.000000e+00> : vector<128xf32>
    %57 = vector.multi_reduction <add>, %56, %cst_25 [1] : vector<128x128xf32> to vector<128xf32>
    %58 = vector.shape_cast %57 : vector<128xf32> to vector<128x1xf32>
    %59 = tpu.reciprocal %58 {approx = true} : vector<128x1xf32> -> vector<128x1xf32>
    %60 = vector.broadcast %59 : vector<128x1xf32> to vector<128x128xf32>
    %61 = arith.mulf %56, %60 : vector<128x128xf32>
    %62 = arith.truncf %61 : vector<128x128xf32> to vector<128x128xbf16>
    %cst_26 = arith.constant dense<0.000000e+00> : vector<128x64xf32>
    %63 = tpu.matmul %62, %50, %cst_26 {dimension_numbers = #tpu.dot_dimension_numbers<[1], [0], [0], [1], [0, 0, 1, 1], [], []>} : vector<128x128xbf16>, vector<128x64xbf16>, vector<128x64xf32> -> vector<128x64xf32>
    %64 = arith.truncf %63 : vector<128x64xf32> to vector<128x64xbf16>
    %65 = tpu.concatenate %42, %64 in 1 : vector<128x64xbf16>, vector<128x64xbf16> -> vector<128x128xbf16>
    %c128_i32_27 = arith.constant 128 : i32
    %66 = arith.muli %arg2, %c128_i32_27 : i32
    %67 = tpu.assume_multiple %66, 128 : i32
    %c0_28 = arith.constant 0 : index
    %68 = arith.index_cast %67 : i32 to index
    %69 = vector.load %arg11[%c0_28, %68] : memref<128x256xbf16, #tpu.memory_space<vmem>>, vector<128x128xbf16>
    tpu.vector_store %arg11[%c0_28, %68], %65 {strides = array<i32>} : memref<128x256xbf16, #tpu.memory_space<vmem>>, vector<128x128xbf16>,
    %c1_i32 = arith.constant 1 : i32
    %70 = arith.cmpi eq, %arg2, %c1_i32 : i32
    %71 = arith.extui %70 : i1 to i32
    %c0_i32 = arith.constant 0 : i32
    %72 = arith.cmpi ne, %71, %c0_i32 : i32
    scf.if %72 {
      %c0_29 = arith.constant 0 : index
      %c0_30 = arith.constant 0 : index
      %73 = vector.load %arg11[%c0_29, %c0_30] : memref<128x256xbf16, #tpu.memory_space<vmem>>, vector<128x256xbf16>
      %c0_31 = arith.constant 0 : index
      %c0_32 = arith.constant 0 : index
      %74 = vector.load %arg6[%c0_31, %c0_32] : memref<256x256xbf16, #tpu.memory_space<vmem>>, vector<256x256xbf16>
      %cst_33 = arith.constant dense<0.000000e+00> : vector<128x256xf32>
      %75 = tpu.matmul %73, %74, %cst_33 {dimension_numbers = #tpu.dot_dimension_numbers<[1], [0], [0], [1], [0, 0, 1, 1], [], []>} : vector<128x256xbf16>, vector<256x256xbf16>, vector<128x256xf32> -> vector<128x256xf32>
      %c0_34 = arith.constant 0 : index
      %c0_35 = arith.constant 0 : index
      %76 = vector.load %arg9[%c0_34, %c0_35] : memref<1x256xf32, #tpu.memory_space<vmem>>, vector<1x256xf32>
      %77 = vector.broadcast %76 : vector<1x256xf32> to vector<128x256xf32>
      %78 = arith.addf %75, %77 : vector<128x256xf32>
      %c0_36 = arith.constant 0 : index
      %c0_37 = arith.constant 0 : index
      %c0_38 = arith.constant 0 : index
      %79 = vector.load %arg10[%c0_36, %c0_37, %c0_38] : memref<1x128x256xf32, #tpu.memory_space<vmem>>, vector<1x128x256xf32>
      %80 = vector.shape_cast %79 : vector<1x128x256xf32> to vector<128x256xf32>
      %81 = vector.shape_cast %78 : vector<128x256xf32> to vector<1x128x256xf32>
      tpu.vector_store %arg10[%c0_36, %c0_37, %c0_38], %81 {strides = array<i32>} : memref<1x128x256xf32, #tpu.memory_space<vmem>>, vector<1x128x256xf32>,
    } else {
    }
    return
  }
  func.func @transform_0(%arg0: i32, %arg1: i32, %arg2: i32) -> (i32, i32, i32) {
    %c0_i32 = arith.constant 0 : i32
    %c0_i32_0 = arith.constant 0 : i32
    %c0_i32_1 = arith.constant 0 : i32
    return %arg0, %c0_i32, %c0_i32_0 : i32, i32, i32
  }
  func.func @transform_1(%arg0: i32, %arg1: i32, %arg2: i32) -> (i32, i32, i32) {
    %c0_i32 = arith.constant 0 : i32
    %c0_i32_0 = arith.constant 0 : i32
    %c0_i32_1 = arith.constant 0 : i32
    return %arg2, %c0_i32, %c0_i32_0 : i32, i32, i32
  }
  func.func @transform_2(%arg0: i32, %arg1: i32, %arg2: i32) -> (i32, i32, i32) {
    %c0_i32 = arith.constant 0 : i32
    %c0_i32_0 = arith.constant 0 : i32
    %c0_i32_1 = arith.constant 0 : i32
    return %arg2, %c0_i32, %c0_i32_0 : i32, i32, i32
  }
  func.func @transform_3(%arg0: i32, %arg1: i32, %arg2: i32) -> (i32, i32) {
    %c0_i32 = arith.constant 0 : i32
    %c0_i32_0 = arith.constant 0 : i32
    %c0_i32_1 = arith.constant 0 : i32
    return %c0_i32, %c0_i32_0 : i32, i32
  }
  func.func @transform_4(%arg0: i32, %arg1: i32, %arg2: i32) -> (i32, i32, i32) {
    %c0_i32 = arith.constant 0 : i32
    %c0_i32_0 = arith.constant 0 : i32
    %c0_i32_1 = arith.constant 0 : i32
    return %arg2, %c0_i32, %c0_i32_0 : i32, i32, i32
  }
  func.func @transform_5(%arg0: i32, %arg1: i32, %arg2: i32) -> (i32, i32, i32) {
    %c0_i32 = arith.constant 0 : i32
    %c0_i32_0 = arith.constant 0 : i32
    %c0_i32_1 = arith.constant 0 : i32
    return %arg2, %c0_i32, %c0_i32_0 : i32, i32, i32
  }
  func.func @transform_6(%arg0: i32, %arg1: i32, %arg2: i32) -> (i32, i32) {
    %c0_i32 = arith.constant 0 : i32
    %c0_i32_0 = arith.constant 0 : i32
    %c0_i32_1 = arith.constant 0 : i32
    return %c0_i32, %c0_i32_0 : i32, i32
  }
  func.func @transform_7(%arg0: i32, %arg1: i32, %arg2: i32) -> (i32, i32, i32) {
    %c0_i32 = arith.constant 0 : i32
    %c0_i32_0 = arith.constant 0 : i32
    return %arg0, %arg1, %c0_i32 : i32, i32, i32
  }
}

</mosaic_0001>

<llo_original>
// kernel: tpu_custom_call.1
$region0: #{tpu_custom_call.1}
  #allocation0 [shape = 'u32[]', space=smem, size = 0x4, offset = 0x4, fixed_abs, tag = 'smem constant byte address 0x4 - core index']
  #allocation1 [shape = 'u32[144,128]{1,0:T(1,128)}', space=vmem, size = 0x12000, scoped, tag = 'internal scratch']
  #allocation2 [shape = 'bf16[128,256]{1,0:T(16,128)(2,1)}', space=vmem, size = 0x10000, scoped, tag = 'scratch operand']
  %s0 = inlined_call_operand.hbm [shape: bf16[2,128,256], index: 0, kind: input, shape index: {}]
  %s1 = inlined_call_operand.hbm [shape: bf16[2,256,128], index: 1, kind: input, shape index: {}]
  %s2 = inlined_call_operand.hbm [shape: bf16[2,256,256], index: 2, kind: input, shape index: {}]
  %s3 = inlined_call_operand.hbm [shape: bf16[256,256], index: 3, kind: input, shape index: {}]
  %s4 = inlined_call_operand.hbm [shape: f32[2,1,128], index: 4, kind: input, shape index: {}]
  %s5 = inlined_call_operand.hbm [shape: f32[2,1,256], index: 5, kind: input, shape index: {}]
  %s6 = inlined_call_operand.hbm [shape: f32[1,256], index: 6, kind: input, shape index: {}]
  %s7 = inlined_call_operand.hbm [shape: f32[2,128,256], index: 7, kind: output, shape index: {}]
  %s8 = sld [smem:[#allocation0]]
  $region93: #{tpu_custom_call.1} parent=0
    _
  %s10 = ssub.s32 1, %s8
  %s11 = scalar_select 0, %s10, %s8
  $region1: #{tpu_custom_call.1} parent=0
    #allocation3 [shape = 'u8[131072]{0}', space=vmem, size = 0x20000, scoped, tag = 'input window, operand 0']
    #allocation4 [shape = 's32[2]{0}', space=sflag, size = 0x8, scoped, tag = 'scoped memory for tpu_custom_call.1']
    #allocation5 [shape = 's32[2]{0}', space=sflag, size = 0x8, scoped, tag = 'scoped memory for tpu_custom_call.1']
    #allocation6 [shape = 'u8[131072]{0}', space=vmem, size = 0x20000, scoped, tag = 'input window, operand 1']
    #allocation7 [shape = 's32[2]{0}', space=sflag, size = 0x8, scoped, tag = 'scoped memory for tpu_custom_call.1']
    #allocation8 [shape = 'u8[262144]{0}', space=vmem, size = 0x40000, scoped, tag = 'input window, operand 2']
    #allocation9 [shape = 'u8[131072]{0}', space=vmem, size = 0x20000, scoped, tag = 'input window, operand 3, single buffered']
    #allocation10 [shape = 's32[1]{0}', space=sflag, size = 0x4, scoped, tag = 'scoped memory for tpu_custom_call.1']
    #allocation11 [shape = 'u8[1024]{0}', space=vmem, size = 0x400, scoped, tag = 'input window, operand 4']
    #allocation12 [shape = 'u8[2048]{0}', space=vmem, size = 0x800, scoped, tag = 'input window, operand 5']
    #allocation13 [shape = 'u8[1024]{0}', space=vmem, size = 0x400, scoped, tag = 'input window, operand 6, single buffered']
    #allocation14 [shape = 'u8[262144]{0}', space=vmem, size = 0x40000, scoped, tag = 'output window, operand 0']
    %12 = vsyncpa [#allocation4], 0
    %s13 = scalar_lea.sflag [#allocation4], 1
    %14 = vsyncpa %s13, 0
    %15 = vsyncpa [#allocation7], 0
    %s16 = scalar_lea.sflag [#allocation7], 1
    %17 = vsyncpa %s16, 0
    %18 = vsyncpa [#allocation10], 0
    %19 = vsyncpa [#allocation5], 0
    %s20 = scalar_lea.sflag [#allocation5], 1
    %21 = vsyncpa %s20, 0
    loop: start=0, step=1, limit=6
    $region2: #{tpu_custom_call.1} parent=1 // loop_pre_header
      _
    $region3: #{tpu_custom_call.1} parent=1 // loop_header
      %s23 = sphi 0, %s27
      %p24 = scmp.ge.s32.totalorder %s23, 6
      %s30 = sphi 0, %s49
      %s31 = sphi 0, %s45
      %s32 = sphi 0, %s41
      %s33 = sphi 0, %s30
      %s34 = sphi 0, %s31
      %s35 = sphi 0, %s32
      %s36 = sphi 0, %s33
      %s37 = sphi 0, %s34
      %s38 = sphi 0, %s35
      %s52 = sphi 0, %s54
      %s55 = sphi 0, %s52
      %s56 = sphi 0, %s55
      %s72 = sphi 0, %s56
      %s78 = sphi 0, %s80
      %s81 = sphi 0, %s78
      %s82 = sphi 0, %s81
      %s98 = sphi 0, %s82
      %s104 = sphi 0, %s106
      %s107 = sphi 0, %s104
      %s108 = sphi 0, %s107
      %s124 = sphi 0, %s108
      %s128 = sphi 0, %s128
      %s130 = sphi 0, %s128
      %s131 = sphi 0, %s130
      %s145 = sphi 0, %s131
      %s151 = sphi 0, %s153
      %s154 = sphi 0, %s151
      %s155 = sphi 0, %s154
      %s171 = sphi 0, %s155
      %s177 = sphi 0, %s179
      %s180 = sphi 0, %s177
      %s181 = sphi 0, %s180
      %s197 = sphi 0, %s181
      %s201 = sphi 0, %s201
      %s203 = sphi 0, %s201
      %s204 = sphi 0, %s203
      %s218 = sphi 0, %s204
      %s226 = sphi 0, %s228
      %s229 = sphi 0, %s226
      %s230 = sphi 0, %s229
      %s246 = sphi 0, %s230
    $region4: #{tpu_custom_call.1} parent=1 // loop_header_branch
      %26 = sbr.rel (%p24) target = $region8
    $region5: #{tpu_custom_call.1} parent=1 // loop_body
      %s28 = ssub.s32 %s23, 1
      %s29 = ssub.s32 %s23, 2
      %s39 = sadd.s32 1, %s32
      %p40 = scmp.ge.s32.totalorder %s39, 2
      %s41 = scalar_select %p40, 0, %s39
      %s42 = sadd.s32 1, %s31
      %s43 = scalar_select %p40, %s42, %s31
      %p44 = scmp.ge.s32.totalorder %s43, 1
      %s45 = scalar_select %p44, 0, %s43
      %s46 = sadd.s32 1, %s30
      %s47 = scalar_select %p44, %s46, %s30
      %p48 = scmp.ge.s32.totalorder %s47, 2
      %s49 = scalar_select %p48, 0, %s47
      %s50 = ssub.s32 %s30, %s49
      %p51 = scmp.eq.s32.totalorder %s50, 0
      %s53 = sadd.s32 %s52, 1
      %s54 = scalar_select %p51, %s52, %s53
      %p57 = pneg %p51
      %p58 = scmp.eq.s32.totalorder %s23, 3
      %p59 = por %p57, %p58
      %p60 = scmp.ne.s32.totalorder %s52, %s55
      %p61 = scmp.eq.s32.totalorder %s23, 0
      %p62 = por %p60, %p61
      %p63 = scmp.ne.s32.totalorder %s52, %s55
      %p64 = scmp.eq.s32.totalorder %s28, 3
      %p65 = por %p63, %p64
      %p66 = scmp.ne.s32.totalorder %s55, %s56
      %p67 = scmp.eq.s32.totalorder %s28, 0
      %p68 = por %p66, %p67
      %p69 = scmp.ne.s32.totalorder %s55, %s56
      %p70 = scmp.eq.s32.totalorder %s29, 3
      %p71 = por %p69, %p70
      %p73 = scmp.ne.s32.totalorder %s56, %s72
      %p74 = scmp.eq.s32.totalorder %s29, 0
      %p75 = por %p73, %p74
      %s76 = ssub.s32 %s32, %s41
      %p77 = scmp.eq.s32.totalorder %s76, 0
      %s79 = sadd.s32 %s78, 1
      %s80 = scalar_select %p77, %s78, %s79
      %p83 = pneg %p77
      %p84 = scmp.eq.s32.totalorder %s23, 3
      %p85 = por %p83, %p84
      %p86 = scmp.ne.s32.totalorder %s78, %s81
      %p87 = scmp.eq.s32.totalorder %s23, 0
      %p88 = por %p86, %p87
      %p89 = scmp.ne.s32.totalorder %s78, %s81
      %p90 = scmp.eq.s32.totalorder %s28, 3
      %p91 = por %p89, %p90
      %p92 = scmp.ne.s32.totalorder %s81, %s82
      %p93 = scmp.eq.s32.totalorder %s28, 0
      %p94 = por %p92, %p93
      %p95 = scmp.ne.s32.totalorder %s81, %s82
      %p96 = scmp.eq.s32.totalorder %s29, 3
      %p97 = por %p95, %p96
      %p99 = scmp.ne.s32.totalorder %s82, %s98
      %p100 = scmp.eq.s32.totalorder %s29, 0
      %p101 = por %p99, %p100
      %s102 = ssub.s32 %s32, %s41
      %p103 = scmp.eq.s32.totalorder %s102, 0
      %s105 = sadd.s32 %s104, 1
      %s106 = scalar_select %p103, %s104, %s105
      %p109 = pneg %p103
      %p110 = scmp.eq.s32.totalorder %s23, 3
      %p111 = por %p109, %p110
      %p112 = scmp.ne.s32.totalorder %s104, %s107
      %p113 = scmp.eq.s32.totalorder %s23, 0
      %p114 = por %p112, %p113
      %p115 = scmp.ne.s32.totalorder %s104, %s107
      %p116 = scmp.eq.s32.totalorder %s28, 3
      %p117 = por %p115, %p116
      %p118 = scmp.ne.s32.totalorder %s107, %s108
      %p119 = scmp.eq.s32.totalorder %s28, 0
      %p120 = por %p118, %p119
      %p121 = scmp.ne.s32.totalorder %s107, %s108
      %p122 = scmp.eq.s32.totalorder %s29, 3
      %p123 = por %p121, %p122
      %p125 = scmp.ne.s32.totalorder %s108, %s124
      %p126 = scmp.eq.s32.totalorder %s29, 0
      %p127 = por %p125, %p126
      %s129 = sadd.s32 %s128, 1
      %p132 = scmp.eq.s32.totalorder %s23, 3
      %p133 = scmp.ne.s32.totalorder %s128, %s130
      %p134 = scmp.eq.s32.totalorder %s23, 0
      %p135 = por %p133, %p134
      %p136 = scmp.ne.s32.totalorder %s128, %s130
      %p137 = scmp.eq.s32.totalorder %s28, 3
      %p138 = por %p136, %p137
      %p139 = scmp.ne.s32.totalorder %s130, %s131
      %p140 = scmp.eq.s32.totalorder %s28, 0
      %p141 = por %p139, %p140
      %p142 = scmp.ne.s32.totalorder %s130, %s131
      %p143 = scmp.eq.s32.totalorder %s29, 3
      %p144 = por %p142, %p143
      %p146 = scmp.ne.s32.totalorder %s131, %s145
      %p147 = scmp.eq.s32.totalorder %s29, 0
      %p148 = por %p146, %p147
      %s149 = ssub.s32 %s32, %s41
      %p150 = scmp.eq.s32.totalorder %s149, 0
      %s152 = sadd.s32 %s151, 1
      %s153 = scalar_select %p150, %s151, %s152
      %p156 = pneg %p150
      %p157 = scmp.eq.s32.totalorder %s23, 3
      %p158 = por %p156, %p157
      %p159 = scmp.ne.s32.totalorder %s151, %s154
      %p160 = scmp.eq.s32.totalorder %s23, 0
      %p161 = por %p159, %p160
      %p162 = scmp.ne.s32.totalorder %s151, %s154
      %p163 = scmp.eq.s32.totalorder %s28, 3
      %p164 = por %p162, %p163
      %p165 = scmp.ne.s32.totalorder %s154, %s155
      %p166 = scmp.eq.s32.totalorder %s28, 0
      %p167 = por %p165, %p166
      %p168 = scmp.ne.s32.totalorder %s154, %s155
      %p169 = scmp.eq.s32.totalorder %s29, 3
      %p170 = por %p168, %p169
      %p172 = scmp.ne.s32.totalorder %s155, %s171
      %p173 = scmp.eq.s32.totalorder %s29, 0
      %p174 = por %p172, %p173
      %s175 = ssub.s32 %s32, %s41
      %p176 = scmp.eq.s32.totalorder %s175, 0
      %s178 = sadd.s32 %s177, 1
      %s179 = scalar_select %p176, %s177, %s178
      %p182 = pneg %p176
      %p183 = scmp.eq.s32.totalorder %s23, 3
      %p184 = por %p182, %p183
      %p185 = scmp.ne.s32.totalorder %s177, %s180
      %p186 = scmp.eq.s32.totalorder %s23, 0
      %p187 = por %p185, %p186
      %p188 = scmp.ne.s32.totalorder %s177, %s180
      %p189 = scmp.eq.s32.totalorder %s28, 3
      %p190 = por %p188, %p189
      %p191 = scmp.ne.s32.totalorder %s180, %s181
      %p192 = scmp.eq.s32.totalorder %s28, 0
      %p193 = por %p191, %p192
      %p194 = scmp.ne.s32.totalorder %s180, %s181
      %p195 = scmp.eq.s32.totalorder %s29, 3
      %p196 = por %p194, %p195
      %p198 = scmp.ne.s32.totalorder %s181, %s197
      %p199 = scmp.eq.s32.totalorder %s29, 0
      %p200 = por %p198, %p199
      %s202 = sadd.s32 %s201, 1
      %p205 = scmp.eq.s32.totalorder %s23, 3
      %p206 = scmp.ne.s32.totalorder %s201, %s203
      %p207 = scmp.eq.s32.totalorder %s23, 0
      %p208 = por %p206, %p207
      %p209 = scmp.ne.s32.totalorder %s201, %s203
      %p210 = scmp.eq.s32.totalorder %s28, 3
      %p211 = por %p209, %p210
      %p212 = scmp.ne.s32.totalorder %s203, %s204
      %p213 = scmp.eq.s32.totalorder %s28, 0
      %p214 = por %p212, %p213
      %p215 = scmp.ne.s32.totalorder %s203, %s204
      %p216 = scmp.eq.s32.totalorder %s29, 3
      %p217 = por %p215, %p216
      %p219 = scmp.ne.s32.totalorder %s204, %s218
      %p220 = scmp.eq.s32.totalorder %s29, 0
      %p221 = por %p219, %p220
      %s222 = ssub.s32 %s30, %s49
      %s223 = ssub.s32 %s31, %s45
      %s224 = sor.u32 %s222, %s223
      %p225 = scmp.eq.s32.totalorder %s224, 0
      %s227 = sadd.s32 %s226, 1
      %s228 = scalar_select %p225, %s226, %s227
      %p231 = pneg %p225
      %p232 = scmp.eq.s32.totalorder %s23, 3
      %p233 = por %p231, %p232
      %p234 = scmp.ne.s32.totalorder %s226, %s229
      %p235 = scmp.eq.s32.totalorder %s23, 0
      %p236 = por %p234, %p235
      %p237 = scmp.ne.s32.totalorder %s226, %s229
      %p238 = scmp.eq.s32.totalorder %s28, 3
      %p239 = por %p237, %p238
      %p240 = scmp.ne.s32.totalorder %s229, %s230
      %p241 = scmp.eq.s32.totalorder %s28, 0
      %p242 = por %p240, %p241
      %p243 = scmp.ne.s32.totalorder %s229, %s230
      %p244 = scmp.eq.s32.totalorder %s29, 3
      %p245 = por %p243, %p244
      %p247 = scmp.ne.s32.totalorder %s230, %s246
      %p248 = scmp.eq.s32.totalorder %s29, 0
      %p249 = por %p247, %p248
      %p250 = scmp.le.s32.totalorder 1, %s23
      %p251 = scmp.lt.s32.totalorder %s23, 5
      %p252 = pnand %p250, %p251
      %p253 = pneg %p252
      // Predicated region
      $region9: #{tpu_custom_call.1} parent=5 // pred_check
        _
      $region10: #{tpu_custom_call.1} parent=5 // pred_check_branch
        %255 = sbr.rel (%p252) target = $region12
      $region11: #{tpu_custom_call.1} parent=5 // pred_region
        %s256 = ssub.s32 %s23, 1
        // Predicated region
        $region13: #{tpu_custom_call.1} parent=11 // pred_check
          %p257 = pneg %p141
        $region14: #{tpu_custom_call.1} parent=11 // pred_check_branch
          %259 = sbr.rel (%p257) target = $region16
        $region15: #{tpu_custom_call.1} parent=11 // pred_region
          %s261 = ssub.s32 4096, 4096
          %262 = vsyncadd [#allocation10], %s261
          %s263 = sshll.u32 [#allocation9], 4
          %s264 = int_to_ptr.vmem [resolvable:$true] %s263
          %269 = dma.hbm_to_vmem [thread:$0]  %s3, 4096, %s264, [#allocation10], 128, 128, 8
        $region16: #{tpu_custom_call.1} parent=11 // pred_fallthru
          _
        // Predicated region
        $region17: #{tpu_custom_call.1} parent=11 // pred_check
          %p270 = pneg %p214
        $region18: #{tpu_custom_call.1} parent=11 // pred_check_branch
          %272 = sbr.rel (%p270) target = $region20
        $region19: #{tpu_custom_call.1} parent=11 // pred_region
          %s274 = ssub.s32 32, 32
          %275 = vsyncadd [#allocation10], %s274
          %s277 = sshll.u32 [#allocation13], 4
          %s278 = int_to_ptr.vmem [resolvable:$true] %s277
          %280 = dma.hbm_to_vmem [thread:$0]  %s6, 32, %s278, [#allocation10]
        $region20: #{tpu_custom_call.1} parent=11 // pred_fallthru
          _
      $region12: #{tpu_custom_call.1} parent=5 // pred_fallthru
        _
      %p281 = scmp.lt.s32.totalorder %s23, 4
      // Predicated region
      $region21: #{tpu_custom_call.1} parent=5 // pred_check
        %p282 = pneg %p281
      $region22: #{tpu_custom_call.1} parent=5 // pred_check_branch
        %284 = sbr.rel (%p282) target = $region24
      $region23: #{tpu_custom_call.1} parent=5 // pred_region
        // Predicated region
        $region25: #{tpu_custom_call.1} parent=23 // pred_check
          %p285 = pneg %p62
        $region26: #{tpu_custom_call.1} parent=23 // pred_check_branch
          %287 = sbr.rel (%p285) target = $region28
        $region27: #{tpu_custom_call.1} parent=23 // pred_region
          %s288 = sand.u32 %s23, 1
          %s289 = scalar_lea.sflag [#allocation4], %s288
          %s290 = sand.u32 %s52, 1
          %s291 = smul.addr %s290, 128
          %s292 = scalar_lea.vmem [#allocation3], %s291
          %s294 = ssub.s32 2048, 2048
          %295 = vsyncadd %s289, %s294
          %s296 = smul.addr %s30, 32
          %s297 = smul.addr %s296, 64
          %s298 = scalar_lea.hbm %s0, %s297
          %s299 = sshll.u32 %s292, 4
          %s300 = int_to_ptr.vmem [resolvable:$true] %s299
          %305 = dma.hbm_to_vmem [thread:$0]  %s298, 2048, %s300, %s289, 128, 128, 8
        $region28: #{tpu_custom_call.1} parent=23 // pred_fallthru
          _
        // Predicated region
        $region29: #{tpu_custom_call.1} parent=23 // pred_check
          %p306 = pneg %p88
        $region30: #{tpu_custom_call.1} parent=23 // pred_check_branch
          %308 = sbr.rel (%p306) target = $region32
        $region31: #{tpu_custom_call.1} parent=23 // pred_region
          %s309 = sand.u32 %s23, 1
          %s310 = scalar_lea.sflag [#allocation7], %s309
          %s311 = sand.u32 %s78, 1
          %s312 = smul.addr %s311, 128
          %s313 = scalar_lea.vmem [#allocation6], %s312
          %s315 = ssub.s32 2048, 2048
          %316 = vsyncadd %s310, %s315
          %s317 = smul.addr %s32, 32
          %s318 = smul.addr %s317, 64
          %s319 = scalar_lea.hbm %s1, %s318
          %s320 = sshll.u32 %s313, 4
          %s321 = int_to_ptr.vmem [resolvable:$true] %s320
          %326 = dma.hbm_to_vmem [thread:$0]  %s319, 2048, %s321, %s310, 64, 64, 4
        $region32: #{tpu_custom_call.1} parent=23 // pred_fallthru
          _
        // Predicated region
        $region33: #{tpu_custom_call.1} parent=23 // pred_check
          %p327 = pneg %p114
        $region34: #{tpu_custom_call.1} parent=23 // pred_check_branch
          %329 = sbr.rel (%p327) target = $region36
        $region35: #{tpu_custom_call.1} parent=23 // pred_region
          %s330 = sand.u32 %s23, 1
          %s331 = scalar_lea.sflag [#allocation7], %s330
          %s332 = sand.u32 %s104, 1
          %s333 = smul.addr %s332, 256
          %s334 = scalar_lea.vmem [#allocation8], %s333
          %s336 = ssub.s32 4096, 4096
          %337 = vsyncadd %s331, %s336
          %s338 = smul.addr %s32, 64
          %s339 = smul.addr %s338, 64
          %s340 = scalar_lea.hbm %s2, %s339
          %s341 = sshll.u32 %s334, 4
          %s342 = int_to_ptr.vmem [resolvable:$true] %s341
          %347 = dma.hbm_to_vmem [thread:$0]  %s340, 4096, %s342, %s331, 128, 128, 8
        $region36: #{tpu_custom_call.1} parent=23 // pred_fallthru
          _
        // Predicated region
        $region37: #{tpu_custom_call.1} parent=23 // pred_check
          %p348 = pneg %p161
        $region38: #{tpu_custom_call.1} parent=23 // pred_check_branch
          %350 = sbr.rel (%p348) target = $region40
        $region39: #{tpu_custom_call.1} parent=23 // pred_region
          %s351 = sand.u32 %s23, 1
          %s352 = scalar_lea.sflag [#allocation4], %s351
          %s353 = sand.u32 %s151, 1
          %s354 = scalar_lea.vmem [#allocation11], %s353
          %s356 = ssub.s32 16, 16
          %357 = vsyncadd %s352, %s356
          %s358 = smul.addr %s32, 16
          %s359 = scalar_lea.hbm %s4, %s358
          %s361 = sshll.u32 %s354, 4
          %s362 = int_to_ptr.vmem [resolvable:$true] %s361
          %364 = dma.hbm_to_vmem [thread:$0]  %s359, 16, %s362, %s352
        $region40: #{tpu_custom_call.1} parent=23 // pred_fallthru
          _
        // Predicated region
        $region41: #{tpu_custom_call.1} parent=23 // pred_check
          %p365 = pneg %p187
        $region42: #{tpu_custom_call.1} parent=23 // pred_check_branch
          %367 = sbr.rel (%p365) target = $region44
        $region43: #{tpu_custom_call.1} parent=23 // pred_region
          %s368 = sand.u32 %s23, 1
          %s369 = scalar_lea.sflag [#allocation7], %s368
          %s370 = sand.u32 %s177, 1
          %s371 = smul.addr %s370, 2
          %s372 = scalar_lea.vmem [#allocation12], %s371
          %s374 = ssub.s32 32, 32
          %375 = vsyncadd %s369, %s374
          %s376 = smul.addr %s32, 2
          %s377 = smul.addr %s376, 16
          %s378 = scalar_lea.hbm %s5, %s377
          %s380 = sshll.u32 %s372, 4
          %s381 = int_to_ptr.vmem [resolvable:$true] %s380
          %383 = dma.hbm_to_vmem [thread:$0]  %s378, 32, %s381, %s369
        $region44: #{tpu_custom_call.1} parent=23 // pred_fallthru
          _
      $region24: #{tpu_custom_call.1} parent=5 // pred_fallthru
        _
      %p384 = scmp.le.s32.totalorder 1, %s23
      %p385 = scmp.lt.s32.totalorder %s23, 5
      %p386 = pnand %p384, %p385
      %p387 = pneg %p386
      // Predicated region
      $region45: #{tpu_custom_call.1} parent=5 // pred_check
        _
      $region46: #{tpu_custom_call.1} parent=5 // pred_check_branch
        %389 = sbr.rel (%p386) target = $region48
      $region47: #{tpu_custom_call.1} parent=5 // pred_region
        %s390 = ssub.s32 %s23, 1
        %s391 = sand.u32 %s28, 1
        %s392 = scalar_lea.sflag [#allocation4], %s391
        %s393 = sand.u32 %s55, 1
        %s394 = smul.addr %s393, 128
        %s395 = scalar_lea.vmem [#allocation3], %s394
        // Predicated region
        $region49: #{tpu_custom_call.1} parent=47 // pred_check
          %p396 = pneg %p68
        $region50: #{tpu_custom_call.1} parent=47 // pred_check_branch
          %398 = sbr.rel (%p396) target = $region52
        $region51: #{tpu_custom_call.1} parent=47 // pred_region
          %399 = dma.done %s392, 2048
        $region52: #{tpu_custom_call.1} parent=47 // pred_fallthru
          _
        %s400 = sand.u32 %s28, 1
        %s401 = scalar_lea.sflag [#allocation7], %s400
        %s402 = sand.u32 %s81, 1
        %s403 = smul.addr %s402, 128
        %s404 = scalar_lea.vmem [#allocation6], %s403
        // Predicated region
        $region53: #{tpu_custom_call.1} parent=47 // pred_check
          %p405 = pneg %p94
        $region54: #{tpu_custom_call.1} parent=47 // pred_check_branch
          %407 = sbr.rel (%p405) target = $region56
        $region55: #{tpu_custom_call.1} parent=47 // pred_region
          %408 = dma.done %s401, 2048
        $region56: #{tpu_custom_call.1} parent=47 // pred_fallthru
          _
        %s409 = sand.u32 %s28, 1
        %s410 = scalar_lea.sflag [#allocation7], %s409
        %s411 = sand.u32 %s107, 1
        %s412 = smul.addr %s411, 256
        %s413 = scalar_lea.vmem [#allocation8], %s412
        // Predicated region
        $region57: #{tpu_custom_call.1} parent=47 // pred_check
          %p414 = pneg %p120
        $region58: #{tpu_custom_call.1} parent=47 // pred_check_branch
          %416 = sbr.rel (%p414) target = $region60
        $region59: #{tpu_custom_call.1} parent=47 // pred_region
          %417 = dma.done %s410, 4096
        $region60: #{tpu_custom_call.1} parent=47 // pred_fallthru
          _
        // Predicated region
        $region61: #{tpu_custom_call.1} parent=47 // pred_check
          %p418 = pneg %p141
        $region62: #{tpu_custom_call.1} parent=47 // pred_check_branch
          %420 = sbr.rel (%p418) target = $region64
        $region63: #{tpu_custom_call.1} parent=47 // pred_region
          %421 = dma.done [#allocation10], 4096
        $region64: #{tpu_custom_call.1} parent=47 // pred_fallthru
          _
        %s422 = sand.u32 %s28, 1
        %s423 = scalar_lea.sflag [#allocation4], %s422
        %s424 = sand.u32 %s154, 1
        %s425 = scalar_lea.vmem [#allocation11], %s424
        // Predicated region
        $region65: #{tpu_custom_call.1} parent=47 // pred_check
          %p426 = pneg %p167
        $region66: #{tpu_custom_call.1} parent=47 // pred_check_branch
          %428 = sbr.rel (%p426) target = $region68
        $region67: #{tpu_custom_call.1} parent=47 // pred_region
          %429 = dma.done %s423, 16
        $region68: #{tpu_custom_call.1} parent=47 // pred_fallthru
          _
        %s430 = sand.u32 %s28, 1
        %s431 = scalar_lea.sflag [#allocation7], %s430
        %s432 = sand.u32 %s180, 1
        %s433 = smul.addr %s432, 2
        %s434 = scalar_lea.vmem [#allocation12], %s433
        // Predicated region
        $region69: #{tpu_custom_call.1} parent=47 // pred_check
          %p435 = pneg %p193
        $region70: #{tpu_custom_call.1} parent=47 // pred_check_branch
          %437 = sbr.rel (%p435) target = $region72
        $region71: #{tpu_custom_call.1} parent=47 // pred_region
          %438 = dma.done %s431, 32
        $region72: #{tpu_custom_call.1} parent=47 // pred_fallthru
          _
        // Predicated region
        $region73: #{tpu_custom_call.1} parent=47 // pred_check
          %p439 = pneg %p214
        $region74: #{tpu_custom_call.1} parent=47 // pred_check_branch
          %441 = sbr.rel (%p439) target = $region76
        $region75: #{tpu_custom_call.1} parent=47 // pred_region
          %442 = dma.done [#allocation10], 32
        $region76: #{tpu_custom_call.1} parent=47 // pred_fallthru
          _
        %s443 = sand.u32 %s28, 1
        %s444 = scalar_lea.sflag [#allocation4], %s443
        %s445 = sand.u32 %s55, 1
        %s446 = smul.addr %s445, 128
        %s447 = scalar_lea.vmem [#allocation3], %s446
        %p448 = pneg %p68
        %p449 = pneg %p65
        %s450 = sand.u32 %s28, 1
        %s451 = scalar_lea.sflag [#allocation7], %s450
        %s452 = sand.u32 %s81, 1
        %s453 = smul.addr %s452, 128
        %s454 = scalar_lea.vmem [#allocation6], %s453
        %p455 = pneg %p94
        %p456 = pneg %p91
        %s457 = sand.u32 %s28, 1
        %s458 = scalar_lea.sflag [#allocation7], %s457
        %s459 = sand.u32 %s107, 1
        %s460 = smul.addr %s459, 256
        %s461 = scalar_lea.vmem [#allocation8], %s460
        %p462 = pneg %p120
        %p463 = pneg %p117
        %p464 = pneg %p141
        %p465 = pneg %p138
        %s466 = sand.u32 %s28, 1
        %s467 = scalar_lea.sflag [#allocation4], %s466
        %s468 = sand.u32 %s154, 1
        %s469 = scalar_lea.vmem [#allocation11], %s468
        %p470 = pneg %p167
        %p471 = pneg %p164
        %s472 = sand.u32 %s28, 1
        %s473 = scalar_lea.sflag [#allocation7], %s472
        %s474 = sand.u32 %s180, 1
        %s475 = smul.addr %s474, 2
        %s476 = scalar_lea.vmem [#allocation12], %s475
        %p477 = pneg %p193
        %p478 = pneg %p190
        %p479 = pneg %p214
        %p480 = pneg %p211
        %p481 = pneg %p242
        %p482 = pneg %p239
        %s483 = sand.u32 %s229, 1
        %s484 = scalar_lea.sflag [#allocation5], %s483
        %s485 = sand.u32 %s229, 1
        %s486 = smul.addr %s485, 256
        %s487 = scalar_lea.vmem [#allocation14], %s486
        %s488 = smul.u32 16, %s34
        %v490 = vld [vmem:[%s395] sm:$0xff]
        %v491 = vld [vmem:[%s395 + $0x8] sm:$0xff]
        %v492 = vld [vmem:[%s395 + $0x10] sm:$0xff]
        %v493 = vld [vmem:[%s395 + $0x18] sm:$0xff]
        %v494 = vld [vmem:[%s395 + $0x20] sm:$0xff]
        %v495 = vld [vmem:[%s395 + $0x28] sm:$0xff]
        %v496 = vld [vmem:[%s395 + $0x30] sm:$0xff]
        %v497 = vld [vmem:[%s395 + $0x38] sm:$0xff]
        %v498 = vld [vmem:[%s395 + $0x40] sm:$0xff]
        %v499 = vld [vmem:[%s395 + $0x48] sm:$0xff]
        %v500 = vld [vmem:[%s395 + $0x50] sm:$0xff]
        %v501 = vld [vmem:[%s395 + $0x58] sm:$0xff]
        %v502 = vld [vmem:[%s395 + $0x60] sm:$0xff]
        %v503 = vld [vmem:[%s395 + $0x68] sm:$0xff]
        %v504 = vld [vmem:[%s395 + $0x70] sm:$0xff]
        %v505 = vld [vmem:[%s395 + $0x78] sm:$0xff]
        %s506 = smul.u32 %s34, 128
        %s507 = sshra.s32 %s506, 3
        %s508 = sand.u32 %s506, 7
        %s509 = smul.u32 %s507, 2
        %s510 = smul.addr %s509, 4
        %s511 = scalar_lea.vmem %s395, %s510 [#allocation3]
        %v512 = vld [vmem:[%s511] sm:$0xff]
        %v513 = vld [vmem:[%s511 + $0x8] sm:$0xff]
        %v514 = vld [vmem:[%s511 + $0x10] sm:$0xff]
        %v515 = vld [vmem:[%s511 + $0x18] sm:$0xff]
        %v516 = vld [vmem:[%s511 + $0x20] sm:$0xff]
        %v517 = vld [vmem:[%s511 + $0x28] sm:$0xff]
        %v518 = vld [vmem:[%s511 + $0x30] sm:$0xff]
        %v519 = vld [vmem:[%s511 + $0x38] sm:$0xff]
        %v520 = vld [vmem:[%s511 + $0x40] sm:$0xff]
        %v521 = vld [vmem:[%s511 + $0x48] sm:$0xff]
        %v522 = vld [vmem:[%s511 + $0x50] sm:$0xff]
        %v523 = vld [vmem:[%s511 + $0x58] sm:$0xff]
        %v524 = vld [vmem:[%s511 + $0x60] sm:$0xff]
        %v525 = vld [vmem:[%s511 + $0x68] sm:$0xff]
        %v526 = vld [vmem:[%s511 + $0x70] sm:$0xff]
        %v527 = vld [vmem:[%s511 + $0x78] sm:$0xff]
        %v528 = vld [vmem:[%s404] sm:$0xf]
        %v529 = vld [vmem:[%s404 + $0x4] sm:$0xf]
        %v530 = vld [vmem:[%s404 + $0x8] sm:$0xf]
        %v531 = vld [vmem:[%s404 + $0xc] sm:$0xf]
        %v532 = vld [vmem:[%s404 + $0x10] sm:$0xf]
        %v533 = vld [vmem:[%s404 + $0x14] sm:$0xf]
        %v534 = vld [vmem:[%s404 + $0x18] sm:$0xf]
        %v535 = vld [vmem:[%s404 + $0x1c] sm:$0xf]
        %v536 = vld [vmem:[%s404 + $0x20] sm:$0xf]
        %v537 = vld [vmem:[%s404 + $0x24] sm:$0xf]
        %v538 = vld [vmem:[%s404 + $0x28] sm:$0xf]
        %v539 = vld [vmem:[%s404 + $0x2c] sm:$0xf]
        %v540 = vld [vmem:[%s404 + $0x30] sm:$0xf]
        %v541 = vld [vmem:[%s404 + $0x34] sm:$0xf]
        %v542 = vld [vmem:[%s404 + $0x38] sm:$0xf]
        %v543 = vld [vmem:[%s404 + $0x3c] sm:$0xf]
        %v544 = vld [vmem:[%s404 + $0x40] sm:$0xf]
        %v545 = vld [vmem:[%s404 + $0x44] sm:$0xf]
        %v546 = vld [vmem:[%s404 + $0x48] sm:$0xf]
        %v547 = vld [vmem:[%s404 + $0x4c] sm:$0xf]
        %v548 = vld [vmem:[%s404 + $0x50] sm:$0xf]
        %v549 = vld [vmem:[%s404 + $0x54] sm:$0xf]
        %v550 = vld [vmem:[%s404 + $0x58] sm:$0xf]
        %v551 = vld [vmem:[%s404 + $0x5c] sm:$0xf]
        %v552 = vld [vmem:[%s404 + $0x60] sm:$0xf]
        %v553 = vld [vmem:[%s404 + $0x64] sm:$0xf]
        %v554 = vld [vmem:[%s404 + $0x68] sm:$0xf]
        %v555 = vld [vmem:[%s404 + $0x6c] sm:$0xf]
        %v556 = vld [vmem:[%s404 + $0x70] sm:$0xf]
        %v557 = vld [vmem:[%s404 + $0x74] sm:$0xf]
        %v558 = vld [vmem:[%s404 + $0x78] sm:$0xf]
        %v559 = vld [vmem:[%s404 + $0x7c] sm:$0xf]
        %v560 = vld [vmem:[%s425] sm:$0x1]
        %v562 = vlaneseq
        %v563 = vshrl.u32 %v562, 7
        %v564 = vsub.s32 0, %v563
        %v565 = vrot.slane %v560, %v564
        %v583 = vunpack.c.l.b16 %v512
        %v584 = vunpack.c.h.b16 %v512
        %v585 = vunpack.c.l.b16 %v513
        %v586 = vunpack.c.h.b16 %v513
        %v587 = vunpack.c.l.b16 %v514
        %v588 = vunpack.c.h.b16 %v514
        %v589 = vunpack.c.l.b16 %v515
        %v590 = vunpack.c.h.b16 %v515
        %v591 = vunpack.c.l.b16 %v516
        %v592 = vunpack.c.h.b16 %v516
        %v593 = vunpack.c.l.b16 %v517
        %v594 = vunpack.c.h.b16 %v517
        %v595 = vunpack.c.l.b16 %v518
        %v596 = vunpack.c.h.b16 %v518
        %v597 = vunpack.c.l.b16 %v519
        %v598 = vunpack.c.h.b16 %v519
        %v599 = vunpack.c.l.b16 %v520
        %v600 = vunpack.c.h.b16 %v520
        %v601 = vunpack.c.l.b16 %v521
        %v602 = vunpack.c.h.b16 %v521
        %v603 = vunpack.c.l.b16 %v522
        %v604 = vunpack.c.h.b16 %v522
        %v605 = vunpack.c.l.b16 %v523
        %v606 = vunpack.c.h.b16 %v523
        %v607 = vunpack.c.l.b16 %v524
        %v608 = vunpack.c.h.b16 %v524
        %v609 = vunpack.c.l.b16 %v525
        %v610 = vunpack.c.h.b16 %v525
        %v611 = vunpack.c.l.b16 %v526
        %v612 = vunpack.c.h.b16 %v526
        %v613 = vunpack.c.l.b16 %v527
        %v614 = vunpack.c.h.b16 %v527
        %v615 = vpack.c.b16 %v585, %v583
        %v616 = vpack.c.b16 %v586, %v584
        %v617 = vpack.c.b16 %v589, %v587
        %v618 = vpack.c.b16 %v590, %v588
        %v619 = vpack.c.b16 %v593, %v591
        %v620 = vpack.c.b16 %v594, %v592
        %v621 = vpack.c.b16 %v597, %v595
        %v622 = vpack.c.b16 %v598, %v596
        %v623 = vpack.c.b16 %v601, %v599
        %v624 = vpack.c.b16 %v602, %v600
        %v625 = vpack.c.b16 %v605, %v603
        %v626 = vpack.c.b16 %v606, %v604
        %v627 = vpack.c.b16 %v609, %v607
        %v628 = vpack.c.b16 %v610, %v608
        %v629 = vpack.c.b16 %v613, %v611
        %v630 = vpack.c.b16 %v614, %v612
        %v679 = vunpack.c.l.b16 %v528
        %v680 = vunpack.c.l.b16 %v529
        %v681 = vunpack.c.l.b16 %v530
        %v682 = vunpack.c.l.b16 %v531
        %v683 = vunpack.c.l.b16 %v532
        %v684 = vunpack.c.l.b16 %v533
        %v685 = vunpack.c.l.b16 %v534
        %v686 = vunpack.c.l.b16 %v535
        %v687 = vunpack.c.l.b16 %v536
        %v688 = vunpack.c.l.b16 %v537
        %v689 = vunpack.c.l.b16 %v538
        %v690 = vunpack.c.l.b16 %v539
        %v691 = vunpack.c.l.b16 %v540
        %v692 = vunpack.c.l.b16 %v541
        %v693 = vunpack.c.l.b16 %v542
        %v694 = vunpack.c.l.b16 %v543
        %v695 = vunpack.c.l.b16 %v544
        %v696 = vunpack.c.l.b16 %v545
        %v697 = vunpack.c.l.b16 %v546
        %v698 = vunpack.c.l.b16 %v547
        %v699 = vunpack.c.l.b16 %v548
        %v700 = vunpack.c.l.b16 %v549
        %v701 = vunpack.c.l.b16 %v550
        %v702 = vunpack.c.l.b16 %v551
        %v703 = vunpack.c.l.b16 %v552
        %v704 = vunpack.c.l.b16 %v553
        %v705 = vunpack.c.l.b16 %v554
        %v706 = vunpack.c.l.b16 %v555
        %v707 = vunpack.c.l.b16 %v556
        %v708 = vunpack.c.l.b16 %v557
        %v709 = vunpack.c.l.b16 %v558
        %v710 = vunpack.c.l.b16 %v559
        %v711 = vpack.c.b16 %v680, %v679
        %v712 = vpack.c.b16 %v682, %v681
        %v713 = vpack.c.b16 %v684, %v683
        %v714 = vpack.c.b16 %v686, %v685
        %v715 = vpack.c.b16 %v688, %v687
        %v716 = vpack.c.b16 %v690, %v689
        %v717 = vpack.c.b16 %v692, %v691
        %v718 = vpack.c.b16 %v694, %v693
        %v719 = vpack.c.b16 %v696, %v695
        %v720 = vpack.c.b16 %v698, %v697
        %v721 = vpack.c.b16 %v700, %v699
        %v722 = vpack.c.b16 %v702, %v701
        %v723 = vpack.c.b16 %v704, %v703
        %v724 = vpack.c.b16 %v706, %v705
        %v725 = vpack.c.b16 %v708, %v707
        %v726 = vpack.c.b16 %v710, %v709
        %743 = vmatprep.subr.bf16.mxu0 0
        %744 = vmatpush1.bf16.msra.mxu0 %v711
        %745 = vmatprep.subr.bf16.mxu0 0
        %746 = vmatpush1.bf16.msra.mxu0 %v712
        %747 = vmatprep.subr.bf16.mxu0 0
        %748 = vmatpush1.bf16.msra.mxu0 %v713
        %749 = vmatprep.subr.bf16.mxu0 0
        %750 = vmatpush1.bf16.msra.mxu0 %v714
        %751 = vmatprep.subr.bf16.mxu0 0
        %752 = vmatpush1.bf16.msra.mxu0 %v715
        %753 = vmatprep.subr.bf16.mxu0 0
        %754 = vmatpush1.bf16.msra.mxu0 %v716
        %755 = vmatprep.subr.bf16.mxu0 0
        %756 = vmatpush1.bf16.msra.mxu0 %v717
        %757 = vmatprep.subr.bf16.mxu0 0
        %758 = vmatpush1.bf16.msra.mxu0 %v718
        %759 = vmatprep.subr.bf16.mxu0 0
        %760 = vmatpush1.bf16.msra.mxu0 %v719
        %761 = vmatprep.subr.bf16.mxu0 0
        %762 = vmatpush1.bf16.msra.mxu0 %v720
        %763 = vmatprep.subr.bf16.mxu0 0
        %764 = vmatpush1.bf16.msra.mxu0 %v721
        %765 = vmatprep.subr.bf16.mxu0 0
        %766 = vmatpush1.bf16.msra.mxu0 %v722
        %767 = vmatprep.subr.bf16.mxu0 0
        %768 = vmatpush1.bf16.msra.mxu0 %v723
        %769 = vmatprep.subr.bf16.mxu0 0
        %770 = vmatpush1.bf16.msra.mxu0 %v724
        %771 = vmatprep.subr.bf16.mxu0 0
        %772 = vmatpush1.bf16.msra.mxu0 %v725
        %773 = vmatprep.subr.bf16.mxu0 0
        %774 = vmatpush1.bf16.msra.mxu0 %v726
        %775 = vmatprep.mubr.bf16.mxu0 %v616
        %776 = vmatmul.mubr.bf16.gmra.mrb[0].mxu0 %v615
        %v777 = vpop.f32.mrb[0].mxu0
        %v778 = vadd.f32 %v565, %v777
        %v779 = vpop.f32.mrb[0].mxu0
        %v780 = vpop.f32.mrb[0].mxu0
        %v781 = vadd.f32 %v565, %v780
        %v782 = vpop.f32.mrb[0].mxu0
        %783 = vmatprep.mubr.bf16.mxu0 %v618
        %784 = vmatmul.mubr.bf16.gmra.mrb[0].mxu0 %v617
        %v785 = vpop.f32.mrb[0].mxu0
        %v786 = vadd.f32 %v565, %v785
        %v787 = vpop.f32.mrb[0].mxu0
        %v788 = vpop.f32.mrb[0].mxu0
        %v789 = vadd.f32 %v565, %v788
        %v790 = vpop.f32.mrb[0].mxu0
        %791 = vmatprep.mubr.bf16.mxu0 %v620
        %792 = vmatmul.mubr.bf16.gmra.mrb[0].mxu0 %v619
        %v793 = vpop.f32.mrb[0].mxu0
        %v794 = vadd.f32 %v565, %v793
        %v795 = vpop.f32.mrb[0].mxu0
        %v796 = vpop.f32.mrb[0].mxu0
        %v797 = vadd.f32 %v565, %v796
        %v798 = vpop.f32.mrb[0].mxu0
        %799 = vmatprep.mubr.bf16.mxu0 %v622
        %800 = vmatmul.mubr.bf16.gmra.mrb[0].mxu0 %v621
        %v801 = vpop.f32.mrb[0].mxu0
        %v802 = vadd.f32 %v565, %v801
        %v803 = vpop.f32.mrb[0].mxu0
        %v804 = vpop.f32.mrb[0].mxu0
        %v805 = vadd.f32 %v565, %v804
        %v806 = vpop.f32.mrb[0].mxu0
        %807 = vmatprep.mubr.bf16.mxu0 %v624
        %808 = vmatmul.mubr.bf16.gmra.mrb[0].mxu0 %v623
        %v809 = vpop.f32.mrb[0].mxu0
        %v810 = vadd.f32 %v565, %v809
        %v811 = vpop.f32.mrb[0].mxu0
        %v812 = vpop.f32.mrb[0].mxu0
        %v813 = vadd.f32 %v565, %v812
        %v814 = vpop.f32.mrb[0].mxu0
        %815 = vmatprep.mubr.bf16.mxu0 %v626
        %816 = vmatmul.mubr.bf16.gmra.mrb[0].mxu0 %v625
        %v817 = vpop.f32.mrb[0].mxu0
        %v818 = vadd.f32 %v565, %v817
        %v819 = vpop.f32.mrb[0].mxu0
        %v820 = vpop.f32.mrb[0].mxu0
        %v821 = vadd.f32 %v565, %v820
        %v822 = vpop.f32.mrb[0].mxu0
        %823 = vmatprep.mubr.bf16.mxu0 %v628
        %824 = vmatmul.mubr.bf16.gmra.mrb[0].mxu0 %v627
        %v825 = vpop.f32.mrb[0].mxu0
        %v826 = vadd.f32 %v565, %v825
        %v827 = vpop.f32.mrb[0].mxu0
        %v828 = vpop.f32.mrb[0].mxu0
        %v829 = vadd.f32 %v565, %v828
        %v830 = vpop.f32.mrb[0].mxu0
        %831 = vmatprep.mubr.bf16.mxu0 %v630
        %832 = vmatmul.mubr.bf16.gmra.mrb[0].mxu0 %v629
        %v833 = vpop.f32.mrb[0].mxu0
        %v834 = vadd.f32 %v565, %v833
        %v835 = vpop.f32.mrb[0].mxu0
        %v836 = vpop.f32.mrb[0].mxu0
        %v837 = vadd.f32 %v565, %v836
        %v838 = vpop.f32.mrb[0].mxu0
        %839 = vdwg.mxu0
        %v840 = vld [vmem:[%s413] sm:$0xff]
        %v841 = vld [vmem:[%s413 + $0x8] sm:$0xff]
        %v842 = vld [vmem:[%s413 + $0x10] sm:$0xff]
        %v843 = vld [vmem:[%s413 + $0x18] sm:$0xff]
        %v844 = vld [vmem:[%s413 + $0x20] sm:$0xff]
        %v845 = vld [vmem:[%s413 + $0x28] sm:$0xff]
        %v846 = vld [vmem:[%s413 + $0x30] sm:$0xff]
        %v847 = vld [vmem:[%s413 + $0x38] sm:$0xff]
        %v848 = vld [vmem:[%s413 + $0x40] sm:$0xff]
        %v849 = vld [vmem:[%s413 + $0x48] sm:$0xff]
        %v850 = vld [vmem:[%s413 + $0x50] sm:$0xff]
        %v851 = vld [vmem:[%s413 + $0x58] sm:$0xff]
        %v852 = vld [vmem:[%s413 + $0x60] sm:$0xff]
        %v853 = vld [vmem:[%s413 + $0x68] sm:$0xff]
        %v854 = vld [vmem:[%s413 + $0x70] sm:$0xff]
        %v855 = vld [vmem:[%s413 + $0x78] sm:$0xff]
        %v856 = vld [vmem:[%s413 + $0x80] sm:$0xff]
        %v857 = vld [vmem:[%s413 + $0x88] sm:$0xff]
        %v858 = vld [vmem:[%s413 + $0x90] sm:$0xff]
        %v859 = vld [vmem:[%s413 + $0x98] sm:$0xff]
        %v860 = vld [vmem:[%s413 + $0xa0] sm:$0xff]
        %v861 = vld [vmem:[%s413 + $0xa8] sm:$0xff]
        %v862 = vld [vmem:[%s413 + $0xb0] sm:$0xff]
        %v863 = vld [vmem:[%s413 + $0xb8] sm:$0xff]
        %v864 = vld [vmem:[%s413 + $0xc0] sm:$0xff]
        %v865 = vld [vmem:[%s413 + $0xc8] sm:$0xff]
        %v866 = vld [vmem:[%s413 + $0xd0] sm:$0xff]
        %v867 = vld [vmem:[%s413 + $0xd8] sm:$0xff]
        %v868 = vld [vmem:[%s413 + $0xe0] sm:$0xff]
        %v869 = vld [vmem:[%s413 + $0xe8] sm:$0xff]
        %v870 = vld [vmem:[%s413 + $0xf0] sm:$0xff]
        %v871 = vld [vmem:[%s413 + $0xf8] sm:$0xff]
        %v872 = vld [vmem:[%s434] sm:$0x3]
        %v874 = vlaneseq
        %v875 = vshrl.u32 %v874, 7
        %v876 = vsub.s32 0, %v875
        %v877 = vrot.slane %v872, %v876
        %v878 = vlaneseq
        %v879 = vshrl.u32 %v878, 7
        %v880 = vsub.s32 1, %v879
        %v881 = vrot.slane %v872, %v880
        %v900 = vunpack.c.l.b16 %v490
        %v901 = vunpack.c.h.b16 %v490
        %v902 = vunpack.c.l.b16 %v491
        %v903 = vunpack.c.h.b16 %v491
        %v904 = vunpack.c.l.b16 %v492
        %v905 = vunpack.c.h.b16 %v492
        %v906 = vunpack.c.l.b16 %v493
        %v907 = vunpack.c.h.b16 %v493
        %v908 = vunpack.c.l.b16 %v494
        %v909 = vunpack.c.h.b16 %v494
        %v910 = vunpack.c.l.b16 %v495
        %v911 = vunpack.c.h.b16 %v495
        %v912 = vunpack.c.l.b16 %v496
        %v913 = vunpack.c.h.b16 %v496
        %v914 = vunpack.c.l.b16 %v497
        %v915 = vunpack.c.h.b16 %v497
        %v916 = vunpack.c.l.b16 %v498
        %v917 = vunpack.c.h.b16 %v498
        %v918 = vunpack.c.l.b16 %v499
        %v919 = vunpack.c.h.b16 %v499
        %v920 = vunpack.c.l.b16 %v500
        %v921 = vunpack.c.h.b16 %v500
        %v922 = vunpack.c.l.b16 %v501
        %v923 = vunpack.c.h.b16 %v501
        %v924 = vunpack.c.l.b16 %v502
        %v925 = vunpack.c.h.b16 %v502
        %v926 = vunpack.c.l.b16 %v503
        %v927 = vunpack.c.h.b16 %v503
        %v928 = vunpack.c.l.b16 %v504
        %v929 = vunpack.c.h.b16 %v504
        %v930 = vunpack.c.l.b16 %v505
        %v931 = vunpack.c.h.b16 %v505
        %v932 = vpack.c.b16 %v902, %v900
        %v933 = vpack.c.b16 %v903, %v901
        %v934 = vpack.c.b16 %v906, %v904
        %v935 = vpack.c.b16 %v907, %v905
        %v936 = vpack.c.b16 %v910, %v908
        %v937 = vpack.c.b16 %v911, %v909
        %v938 = vpack.c.b16 %v914, %v912
        %v939 = vpack.c.b16 %v915, %v913
        %v940 = vpack.c.b16 %v918, %v916
        %v941 = vpack.c.b16 %v919, %v917
        %v942 = vpack.c.b16 %v922, %v920
        %v943 = vpack.c.b16 %v923, %v921
        %v944 = vpack.c.b16 %v926, %v924
        %v945 = vpack.c.b16 %v927, %v925
        %v946 = vpack.c.b16 %v930, %v928
        %v947 = vpack.c.b16 %v931, %v929
        %v996 = vunpack.c.l.b16 %v840
        %v997 = vunpack.c.h.b16 %v840
        %v998 = vunpack.c.l.b16 %v841
        %v999 = vunpack.c.h.b16 %v841
        %v1000 = vunpack.c.l.b16 %v842
        %v1001 = vunpack.c.h.b16 %v842
        %v1002 = vunpack.c.l.b16 %v843
        %v1003 = vunpack.c.h.b16 %v843
        %v1004 = vunpack.c.l.b16 %v844
        %v1005 = vunpack.c.h.b16 %v844
        %v1006 = vunpack.c.l.b16 %v845
        %v1007 = vunpack.c.h.b16 %v845
        %v1008 = vunpack.c.l.b16 %v846
        %v1009 = vunpack.c.h.b16 %v846
        %v1010 = vunpack.c.l.b16 %v847
        %v1011 = vunpack.c.h.b16 %v847
        %v1012 = vunpack.c.l.b16 %v848
        %v1013 = vunpack.c.h.b16 %v848
        %v1014 = vunpack.c.l.b16 %v849
        %v1015 = vunpack.c.h.b16 %v849
        %v1016 = vunpack.c.l.b16 %v850
        %v1017 = vunpack.c.h.b16 %v850
        %v1018 = vunpack.c.l.b16 %v851
        %v1019 = vunpack.c.h.b16 %v851
        %v1020 = vunpack.c.l.b16 %v852
        %v1021 = vunpack.c.h.b16 %v852
        %v1022 = vunpack.c.l.b16 %v853
        %v1023 = vunpack.c.h.b16 %v853
        %v1024 = vunpack.c.l.b16 %v854
        %v1025 = vunpack.c.h.b16 %v854
        %v1026 = vunpack.c.l.b16 %v855
        %v1027 = vunpack.c.h.b16 %v855
        %v1028 = vunpack.c.l.b16 %v856
        %v1029 = vunpack.c.h.b16 %v856
        %v1030 = vunpack.c.l.b16 %v857
        %v1031 = vunpack.c.h.b16 %v857
        %v1032 = vunpack.c.l.b16 %v858
        %v1033 = vunpack.c.h.b16 %v858
        %v1034 = vunpack.c.l.b16 %v859
        %v1035 = vunpack.c.h.b16 %v859
        %v1036 = vunpack.c.l.b16 %v860
        %v1037 = vunpack.c.h.b16 %v860
        %v1038 = vunpack.c.l.b16 %v861
        %v1039 = vunpack.c.h.b16 %v861
        %v1040 = vunpack.c.l.b16 %v862
        %v1041 = vunpack.c.h.b16 %v862
        %v1042 = vunpack.c.l.b16 %v863
        %v1043 = vunpack.c.h.b16 %v863
        %v1044 = vunpack.c.l.b16 %v864
        %v1045 = vunpack.c.h.b16 %v864
        %v1046 = vunpack.c.l.b16 %v865
        %v1047 = vunpack.c.h.b16 %v865
        %v1048 = vunpack.c.l.b16 %v866
        %v1049 = vunpack.c.h.b16 %v866
        %v1050 = vunpack.c.l.b16 %v867
        %v1051 = vunpack.c.h.b16 %v867
        %v1052 = vunpack.c.l.b16 %v868
        %v1053 = vunpack.c.h.b16 %v868
        %v1054 = vunpack.c.l.b16 %v869
        %v1055 = vunpack.c.h.b16 %v869
        %v1056 = vunpack.c.l.b16 %v870
        %v1057 = vunpack.c.h.b16 %v870
        %v1058 = vunpack.c.l.b16 %v871
        %v1059 = vunpack.c.h.b16 %v871
        %v1060 = vpack.c.b16 %v998, %v996
        %v1061 = vpack.c.b16 %v999, %v997
        %v1062 = vpack.c.b16 %v1002, %v1000
        %v1063 = vpack.c.b16 %v1003, %v1001
        %v1064 = vpack.c.b16 %v1006, %v1004
        %v1065 = vpack.c.b16 %v1007, %v1005
        %v1066 = vpack.c.b16 %v1010, %v1008
        %v1067 = vpack.c.b16 %v1011, %v1009
        %v1068 = vpack.c.b16 %v1014, %v1012
        %v1069 = vpack.c.b16 %v1015, %v1013
        %v1070 = vpack.c.b16 %v1018, %v1016
        %v1071 = vpack.c.b16 %v1019, %v1017
        %v1072 = vpack.c.b16 %v1022, %v1020
        %v1073 = vpack.c.b16 %v1023, %v1021
        %v1074 = vpack.c.b16 %v1026, %v1024
        %v1075 = vpack.c.b16 %v1027, %v1025
        %v1076 = vpack.c.b16 %v1030, %v1028
        %v1077 = vpack.c.b16 %v1031, %v1029
        %v1078 = vpack.c.b16 %v1034, %v1032
        %v1079 = vpack.c.b16 %v1035, %v1033
        %v1080 = vpack.c.b16 %v1038, %v1036
        %v1081 = vpack.c.b16 %v1039, %v1037
        %v1082 = vpack.c.b16 %v1042, %v1040
        %v1083 = vpack.c.b16 %v1043, %v1041
        %v1084 = vpack.c.b16 %v1046, %v1044
        %v1085 = vpack.c.b16 %v1047, %v1045
        %v1086 = vpack.c.b16 %v1050, %v1048
        %v1087 = vpack.c.b16 %v1051, %v1049
        %v1088 = vpack.c.b16 %v1054, %v1052
        %v1089 = vpack.c.b16 %v1055, %v1053
        %v1090 = vpack.c.b16 %v1058, %v1056
        %v1091 = vpack.c.b16 %v1059, %v1057
        %1124 = vmatprep.subr.bf16.mxu0 %v1061
        %1125 = vmatpush1.bf16.msra.mxu0 %v1060
        %1126 = vmatprep.subr.bf16.mxu0 %v1063
        %1127 = vmatpush1.bf16.msra.mxu0 %v1062
        %1128 = vmatprep.subr.bf16.mxu0 %v1065
        %1129 = vmatpush1.bf16.msra.mxu0 %v1064
        %1130 = vmatprep.subr.bf16.mxu0 %v1067
        %1131 = vmatpush1.bf16.msra.mxu0 %v1066
        %1132 = vmatprep.subr.bf16.mxu0 %v1069
        %1133 = vmatpush1.bf16.msra.mxu0 %v1068
        %1134 = vmatprep.subr.bf16.mxu0 %v1071
        %1135 = vmatpush1.bf16.msra.mxu0 %v1070
        %1136 = vmatprep.subr.bf16.mxu0 %v1073
        %1137 = vmatpush1.bf16.msra.mxu0 %v1072
        %1138 = vmatprep.subr.bf16.mxu0 %v1075
        %1139 = vmatpush1.bf16.msra.mxu0 %v1074
        %1140 = vmatprep.subr.bf16.mxu0 %v1077
        %1141 = vmatpush1.bf16.msra.mxu0 %v1076
        %1142 = vmatprep.subr.bf16.mxu0 %v1079
        %1143 = vmatpush1.bf16.msra.mxu0 %v1078
        %1144 = vmatprep.subr.bf16.mxu0 %v1081
        %1145 = vmatpush1.bf16.msra.mxu0 %v1080
        %1146 = vmatprep.subr.bf16.mxu0 %v1083
        %1147 = vmatpush1.bf16.msra.mxu0 %v1082
        %1148 = vmatprep.subr.bf16.mxu0 %v1085
        %1149 = vmatpush1.bf16.msra.mxu0 %v1084
        %1150 = vmatprep.subr.bf16.mxu0 %v1087
        %1151 = vmatpush1.bf16.msra.mxu0 %v1086
        %1152 = vmatprep.subr.bf16.mxu0 %v1089
        %1153 = vmatpush1.bf16.msra.mxu0 %v1088
        %1154 = vmatprep.subr.bf16.mxu0 %v1091
        %1155 = vmatpush1.bf16.msra.mxu0 %v1090
        %1156 = vmatprep.mubr.bf16.mxu0 %v933
        %1157 = vmatmul.mubr.bf16.gmra.mrb[0].mxu0 %v932
        %v1158 = vpop.f32.mrb[0].mxu0
        %v1159 = vadd.f32 %v877, %v1158
        %v1160 = vpop.f32.mrb[0].mxu0
        %v1161 = vadd.f32 %v881, %v1160
        %v1162 = vpop.f32.mrb[0].mxu0
        %v1163 = vadd.f32 %v877, %v1162
        %v1164 = vpop.f32.mrb[0].mxu0
        %v1165 = vadd.f32 %v881, %v1164
        %1166 = vmatprep.mubr.bf16.mxu0 %v935
        %1167 = vmatmul.mubr.bf16.gmra.mrb[0].mxu0 %v934
        %v1168 = vpop.f32.mrb[0].mxu0
        %v1169 = vadd.f32 %v877, %v1168
        %v1170 = vpop.f32.mrb[0].mxu0
        %v1171 = vadd.f32 %v881, %v1170
        %v1172 = vpop.f32.mrb[0].mxu0
        %v1173 = vadd.f32 %v877, %v1172
        %v1174 = vpop.f32.mrb[0].mxu0
        %v1175 = vadd.f32 %v881, %v1174
        %1176 = vmatprep.mubr.bf16.mxu0 %v937
        %1177 = vmatmul.mubr.bf16.gmra.mrb[0].mxu0 %v936
        %v1178 = vpop.f32.mrb[0].mxu0
        %v1179 = vadd.f32 %v877, %v1178
        %v1180 = vpop.f32.mrb[0].mxu0
        %v1181 = vadd.f32 %v881, %v1180
        %v1182 = vpop.f32.mrb[0].mxu0
        %v1183 = vadd.f32 %v877, %v1182
        %v1184 = vpop.f32.mrb[0].mxu0
        %v1185 = vadd.f32 %v881, %v1184
        %1186 = vmatprep.mubr.bf16.mxu0 %v939
        %1187 = vmatmul.mubr.bf16.gmra.mrb[0].mxu0 %v938
        %v1188 = vpop.f32.mrb[0].mxu0
        %v1189 = vadd.f32 %v877, %v1188
        %v1190 = vpop.f32.mrb[0].mxu0
        %v1191 = vadd.f32 %v881, %v1190
        %v1192 = vpop.f32.mrb[0].mxu0
        %v1193 = vadd.f32 %v877, %v1192
        %v1194 = vpop.f32.mrb[0].mxu0
        %v1195 = vadd.f32 %v881, %v1194
        %1196 = vmatprep.mubr.bf16.mxu0 %v941
        %1197 = vmatmul.mubr.bf16.gmra.mrb[0].mxu0 %v940
        %v1198 = vpop.f32.mrb[0].mxu0
        %v1199 = vadd.f32 %v877, %v1198
        %v1200 = vpop.f32.mrb[0].mxu0
        %v1201 = vadd.f32 %v881, %v1200
        %v1202 = vpop.f32.mrb[0].mxu0
        %v1203 = vadd.f32 %v877, %v1202
        %v1204 = vpop.f32.mrb[0].mxu0
        %v1205 = vadd.f32 %v881, %v1204
        %1206 = vmatprep.mubr.bf16.mxu0 %v943
        %1207 = vmatmul.mubr.bf16.gmra.mrb[0].mxu0 %v942
        %v1208 = vpop.f32.mrb[0].mxu0
        %v1209 = vadd.f32 %v877, %v1208
        %v1210 = vpop.f32.mrb[0].mxu0
        %v1211 = vadd.f32 %v881, %v1210
        %v1212 = vpop.f32.mrb[0].mxu0
        %v1213 = vadd.f32 %v877, %v1212
        %v1214 = vpop.f32.mrb[0].mxu0
        %v1215 = vadd.f32 %v881, %v1214
        %1216 = vmatprep.mubr.bf16.mxu0 %v945
        %1217 = vmatmul.mubr.bf16.gmra.mrb[0].mxu0 %v944
        %v1218 = vpop.f32.mrb[0].mxu0
        %v1219 = vadd.f32 %v877, %v1218
        %v1220 = vpop.f32.mrb[0].mxu0
        %v1221 = vadd.f32 %v881, %v1220
        %v1222 = vpop.f32.mrb[0].mxu0
        %v1223 = vadd.f32 %v877, %v1222
        %v1224 = vpop.f32.mrb[0].mxu0
        %v1225 = vadd.f32 %v881, %v1224
        %1226 = vmatprep.mubr.bf16.mxu0 %v947
        %1227 = vmatmul.mubr.bf16.gmra.mrb[0].mxu0 %v946
        %v1228 = vpop.f32.mrb[0].mxu0
        %v1229 = vadd.f32 %v877, %v1228
        %v1230 = vpop.f32.mrb[0].mxu0
        %v1231 = vadd.f32 %v881, %v1230
        %v1232 = vpop.f32.mrb[0].mxu0
        %v1233 = vadd.f32 %v877, %v1232
        %v1234 = vpop.f32.mrb[0].mxu0
        %v1235 = vadd.f32 %v881, %v1234
        %1236 = vdwg.mxu0
        %v1237 = vmul.f32 %v778, 0.125
        %v1238 = vmul.f32 %v781, 0.125
        %v1239 = vmul.f32 %v786, 0.125
        %v1240 = vmul.f32 %v789, 0.125
        %v1241 = vmul.f32 %v794, 0.125
        %v1242 = vmul.f32 %v797, 0.125
        %v1243 = vmul.f32 %v802, 0.125
        %v1244 = vmul.f32 %v805, 0.125
        %v1245 = vmul.f32 %v810, 0.125
        %v1246 = vmul.f32 %v813, 0.125
        %v1247 = vmul.f32 %v818, 0.125
        %v1248 = vmul.f32 %v821, 0.125
        %v1249 = vmul.f32 %v826, 0.125
        %v1250 = vmul.f32 %v829, 0.125
        %v1251 = vmul.f32 %v834, 0.125
        %v1252 = vmul.f32 %v837, 0.125
        %v1253 = vpack.c.bf16 %v1238, %v1237
        %v1254 = vpack.c.bf16 %v1240, %v1239
        %v1255 = vpack.c.bf16 %v1242, %v1241
        %v1256 = vpack.c.bf16 %v1244, %v1243
        %v1257 = vpack.c.bf16 %v1246, %v1245
        %v1258 = vpack.c.bf16 %v1248, %v1247
        %v1259 = vpack.c.bf16 %v1250, %v1249
        %v1260 = vpack.c.bf16 %v1252, %v1251
        %v1261 = vpack.c.bf16 %v1163, %v1159
        %v1262 = vpack.c.bf16 %v1173, %v1169
        %v1263 = vpack.c.bf16 %v1183, %v1179
        %v1264 = vpack.c.bf16 %v1193, %v1189
        %v1265 = vpack.c.bf16 %v1203, %v1199
        %v1266 = vpack.c.bf16 %v1213, %v1209
        %v1267 = vpack.c.bf16 %v1223, %v1219
        %v1268 = vpack.c.bf16 %v1233, %v1229
        %vm1269 = vcmask 523264
        %v1271 = vsel %vm1269, %v1253, 0
        %v1274 = vsel %vm1269, %v1254, 0
        %v1277 = vsel %vm1269, %v1255, 0
        %v1280 = vsel %vm1269, %v1256, 0
        %v1283 = vsel %vm1269, %v1257, 0
        %v1286 = vsel %vm1269, %v1258, 0
        %v1289 = vsel %vm1269, %v1259, 0
        %v1292 = vsel %vm1269, %v1260, 0
        %v1295 = vsel %vm1269, %v1261, 0
        %v1298 = vsel %vm1269, %v1262, 0
        %v1301 = vsel %vm1269, %v1263, 0
        %v1304 = vsel %vm1269, %v1264, 0
        %v1307 = vsel %vm1269, %v1265, 0
        %v1310 = vsel %vm1269, %v1266, 0
        %v1313 = vsel %vm1269, %v1267, 0
        %v1316 = vsel %vm1269, %v1268, 0
        %1318 = vmatprep.subr.bf16.mxu0 0
        %1319 = vmatpush1.bf16.xpose.msra.mxu0 %v1295
        %1320 = vmatprep.subr.bf16.mxu0 0
        %1321 = vmatpush1.bf16.xpose.msra.mxu0 %v1298
        %1322 = vmatprep.subr.bf16.mxu0 0
        %1323 = vmatpush1.bf16.xpose.msra.mxu0 %v1301
        %1324 = vmatprep.subr.bf16.mxu0 0
        %1325 = vmatpush1.bf16.xpose.msra.mxu0 %v1304
        %1326 = vmatprep.subr.bf16.mxu0 0
        %1327 = vmatpush1.bf16.xpose.msra.mxu0 %v1307
        %1328 = vmatprep.subr.bf16.mxu0 0
        %1329 = vmatpush1.bf16.xpose.msra.mxu0 %v1310
        %1330 = vmatprep.subr.bf16.mxu0 0
        %1331 = vmatpush1.bf16.xpose.msra.mxu0 %v1313
        %1332 = vmatprep.subr.bf16.mxu0 0
        %1333 = vmatpush1.bf16.xpose.msra.mxu0 %v1316
        %1334 = vmatprep.subr.bf16.mxu0 0
        %1335 = vmatpush1.bf16.xpose.msra.mxu0 0
        %1336 = vmatprep.subr.bf16.mxu0 0
        %1337 = vmatpush1.bf16.xpose.msra.mxu0 0
        %1338 = vmatprep.subr.bf16.mxu0 0
        %1339 = vmatpush1.bf16.xpose.msra.mxu0 0
        %1340 = vmatprep.subr.bf16.mxu0 0
        %1341 = vmatpush1.bf16.xpose.msra.mxu0 0
        %1342 = vmatprep.subr.bf16.mxu0 0
        %1343 = vmatpush1.bf16.xpose.msra.mxu0 0
        %1344 = vmatprep.subr.bf16.mxu0 0
        %1345 = vmatpush1.bf16.xpose.msra.mxu0 0
        %1346 = vmatprep.subr.bf16.mxu0 0
        %1347 = vmatpush1.bf16.xpose.msra.mxu0 0
        %1348 = vmatprep.subr.bf16.mxu0 0
        %1349 = vmatpush1.bf16.xpose.msra.mxu0 0
        %1350 = vmatprep.mubr.bf16.mxu0 0
        %1351 = vmatmul.mubr.bf16.gmra.mrb[0].mxu0 %v1271
        %v1352 = vpop.f32.mrb[0].mxu0
        %v1353 = vadd.f32 0.0, %v1352
        %v1354 = vpop.f32.mrb[0].mxu0
        %v1355 = vpop.f32.mrb[0].mxu0
        %v1356 = vadd.f32 0.0, %v1355
        %v1357 = vpop.f32.mrb[0].mxu0
        %1358 = vmatprep.mubr.bf16.mxu0 0
        %1359 = vmatmul.mubr.bf16.gmra.mrb[0].mxu0 %v1274
        %v1360 = vpop.f32.mrb[0].mxu0
        %v1361 = vadd.f32 0.0, %v1360
        %v1362 = vpop.f32.mrb[0].mxu0
        %v1363 = vpop.f32.mrb[0].mxu0
        %v1364 = vadd.f32 0.0, %v1363
        %v1365 = vpop.f32.mrb[0].mxu0
        %1366 = vmatprep.mubr.bf16.mxu0 0
        %1367 = vmatmul.mubr.bf16.gmra.mrb[0].mxu0 %v1277
        %v1368 = vpop.f32.mrb[0].mxu0
        %v1369 = vadd.f32 0.0, %v1368
        %v1370 = vpop.f32.mrb[0].mxu0
        %v1371 = vpop.f32.mrb[0].mxu0
        %v1372 = vadd.f32 0.0, %v1371
        %v1373 = vpop.f32.mrb[0].mxu0
        %1374 = vmatprep.mubr.bf16.mxu0 0
        %1375 = vmatmul.mubr.bf16.gmra.mrb[0].mxu0 %v1280
        %v1376 = vpop.f32.mrb[0].mxu0
        %v1377 = vadd.f32 0.0, %v1376
        %v1378 = vpop.f32.mrb[0].mxu0
        %v1379 = vpop.f32.mrb[0].mxu0
        %v1380 = vadd.f32 0.0, %v1379
        %v1381 = vpop.f32.mrb[0].mxu0
        %1382 = vmatprep.mubr.bf16.mxu0 0
        %1383 = vmatmul.mubr.bf16.gmra.mrb[0].mxu0 %v1283
        %v1384 = vpop.f32.mrb[0].mxu0
        %v1385 = vadd.f32 0.0, %v1384
        %v1386 = vpop.f32.mrb[0].mxu0
        %v1387 = vpop.f32.mrb[0].mxu0
        %v1388 = vadd.f32 0.0, %v1387
        %v1389 = vpop.f32.mrb[0].mxu0
        %1390 = vmatprep.mubr.bf16.mxu0 0
        %1391 = vmatmul.mubr.bf16.gmra.mrb[0].mxu0 %v1286
        %v1392 = vpop.f32.mrb[0].mxu0
        %v1393 = vadd.f32 0.0, %v1392
        %v1394 = vpop.f32.mrb[0].mxu0
        %v1395 = vpop.f32.mrb[0].mxu0
        %v1396 = vadd.f32 0.0, %v1395
        %v1397 = vpop.f32.mrb[0].mxu0
        %1398 = vmatprep.mubr.bf16.mxu0 0
        %1399 = vmatmul.mubr.bf16.gmra.mrb[0].mxu0 %v1289
        %v1400 = vpop.f32.mrb[0].mxu0
        %v1401 = vadd.f32 0.0, %v1400
        %v1402 = vpop.f32.mrb[0].mxu0
        %v1403 = vpop.f32.mrb[0].mxu0
        %v1404 = vadd.f32 0.0, %v1403
        %v1405 = vpop.f32.mrb[0].mxu0
        %1406 = vmatprep.mubr.bf16.mxu0 0
        %1407 = vmatmul.mubr.bf16.gmra.mrb[0].mxu0 %v1292
        %v1408 = vpop.f32.mrb[0].mxu0
        %v1409 = vadd.f32 0.0, %v1408
        %v1410 = vpop.f32.mrb[0].mxu0
        %v1411 = vpop.f32.mrb[0].mxu0
        %v1412 = vadd.f32 0.0, %v1411
        %v1413 = vpop.f32.mrb[0].mxu0
        %1414 = vdwg.mxu0
        %1415 = vmax.xlane.f32.xlu0 %v1353
        %v1416 = vpop.xlane.xlu0 %1415
        %1417 = vmax.xlane.f32.xlu0 %v1356
        %v1418 = vpop.xlane.xlu0 %1417
        %1419 = vmax.xlane.f32.xlu0 %v1361
        %v1420 = vpop.xlane.xlu0 %1419
        %1421 = vmax.xlane.f32.xlu0 %v1364
        %v1422 = vpop.xlane.xlu0 %1421
        %1423 = vmax.xlane.f32.xlu0 %v1369
        %v1424 = vpop.xlane.xlu0 %1423
        %1425 = vmax.xlane.f32.xlu0 %v1372
        %v1426 = vpop.xlane.xlu0 %1425
        %1427 = vmax.xlane.f32.xlu0 %v1377
        %v1428 = vpop.xlane.xlu0 %1427
        %1429 = vmax.xlane.f32.xlu0 %v1380
        %v1430 = vpop.xlane.xlu0 %1429
        %1431 = vmax.xlane.f32.xlu0 %v1385
        %v1432 = vpop.xlane.xlu0 %1431
        %1433 = vmax.xlane.f32.xlu0 %v1388
        %v1434 = vpop.xlane.xlu0 %1433
        %1435 = vmax.xlane.f32.xlu0 %v1393
        %v1436 = vpop.xlane.xlu0 %1435
        %1437 = vmax.xlane.f32.xlu0 %v1396
        %v1438 = vpop.xlane.xlu0 %1437
        %1439 = vmax.xlane.f32.xlu0 %v1401
        %v1440 = vpop.xlane.xlu0 %1439
        %1441 = vmax.xlane.f32.xlu0 %v1404
        %v1442 = vpop.xlane.xlu0 %1441
        %1443 = vmax.xlane.f32.xlu0 %v1409
        %v1444 = vpop.xlane.xlu0 %1443
        %1445 = vmax.xlane.f32.xlu0 %v1412
        %v1446 = vpop.xlane.xlu0 %1445
        %v1447 = vsub.f32 %v1353, %v1416
        %v1448 = vsub.f32 %v1356, %v1418
        %v1449 = vsub.f32 %v1361, %v1420
        %v1450 = vsub.f32 %v1364, %v1422
        %v1451 = vsub.f32 %v1369, %v1424
        %v1452 = vsub.f32 %v1372, %v1426
        %v1453 = vsub.f32 %v1377, %v1428
        %v1454 = vsub.f32 %v1380, %v1430
        %v1455 = vsub.f32 %v1385, %v1432
        %v1456 = vsub.f32 %v1388, %v1434
        %v1457 = vsub.f32 %v1393, %v1436
        %v1458 = vsub.f32 %v1396, %v1438
        %v1459 = vsub.f32 %v1401, %v1440
        %v1460 = vsub.f32 %v1404, %v1442
        %v1461 = vsub.f32 %v1409, %v1444
        %v1462 = vsub.f32 %v1412, %v1446
        %v1463 = vmul.f32 %v1447, 1.442695
        %v1464 = vpow.pop %v1463
        %v1465 = vmul.f32 %v1448, 1.442695
        %v1466 = vpow.pop %v1465
        %v1467 = vmul.f32 %v1449, 1.442695
        %v1468 = vpow.pop %v1467
        %v1469 = vmul.f32 %v1450, 1.442695
        %v1470 = vpow.pop %v1469
        %v1471 = vmul.f32 %v1451, 1.442695
        %v1472 = vpow.pop %v1471
        %v1473 = vmul.f32 %v1452, 1.442695
        %v1474 = vpow.pop %v1473
        %v1475 = vmul.f32 %v1453, 1.442695
        %v1476 = vpow.pop %v1475
        %v1477 = vmul.f32 %v1454, 1.442695
        %v1478 = vpow.pop %v1477
        %v1479 = vmul.f32 %v1455, 1.442695
        %v1480 = vpow.pop %v1479
        %v1481 = vmul.f32 %v1456, 1.442695
        %v1482 = vpow.pop %v1481
        %v1483 = vmul.f32 %v1457, 1.442695
        %v1484 = vpow.pop %v1483
        %v1485 = vmul.f32 %v1458, 1.442695
        %v1486 = vpow.pop %v1485
        %v1487 = vmul.f32 %v1459, 1.442695
        %v1488 = vpow.pop %v1487
        %v1489 = vmul.f32 %v1460, 1.442695
        %v1490 = vpow.pop %v1489
        %v1491 = vmul.f32 %v1461, 1.442695
        %v1492 = vpow.pop %v1491
        %v1493 = vmul.f32 %v1462, 1.442695
        %v1494 = vpow.pop %v1493
        %1495 = vadd.xlane.f32.xlu0 %v1464
        %v1496 = vpop.xlane.xlu0 %1495
        %1497 = vadd.xlane.f32.xlu0 %v1466
        %v1498 = vpop.xlane.xlu0 %1497
        %1499 = vadd.xlane.f32.xlu0 %v1468
        %v1500 = vpop.xlane.xlu0 %1499
        %1501 = vadd.xlane.f32.xlu0 %v1470
        %v1502 = vpop.xlane.xlu0 %1501
        %1503 = vadd.xlane.f32.xlu0 %v1472
        %v1504 = vpop.xlane.xlu0 %1503
        %1505 = vadd.xlane.f32.xlu0 %v1474
        %v1506 = vpop.xlane.xlu0 %1505
        %1507 = vadd.xlane.f32.xlu0 %v1476
        %v1508 = vpop.xlane.xlu0 %1507
        %1509 = vadd.xlane.f32.xlu0 %v1478
        %v1510 = vpop.xlane.xlu0 %1509
        %1511 = vadd.xlane.f32.xlu0 %v1480
        %v1512 = vpop.xlane.xlu0 %1511
        %1513 = vadd.xlane.f32.xlu0 %v1482
        %v1514 = vpop.xlane.xlu0 %1513
        %1515 = vadd.xlane.f32.xlu0 %v1484
        %v1516 = vpop.xlane.xlu0 %1515
        %1517 = vadd.xlane.f32.xlu0 %v1486
        %v1518 = vpop.xlane.xlu0 %1517
        %1519 = vadd.xlane.f32.xlu0 %v1488
        %v1520 = vpop.xlane.xlu0 %1519
        %1521 = vadd.xlane.f32.xlu0 %v1490
        %v1522 = vpop.xlane.xlu0 %1521
        %1523 = vadd.xlane.f32.xlu0 %v1492
        %v1524 = vpop.xlane.xlu0 %1523
        %1525 = vadd.xlane.f32.xlu0 %v1494
        %v1526 = vpop.xlane.xlu0 %1525
        %v1527 = vrcp.pop %v1496
        %v1528 = vrcp.pop %v1498
        %v1529 = vrcp.pop %v1500
        %v1530 = vrcp.pop %v1502
        %v1531 = vrcp.pop %v1504
        %v1532 = vrcp.pop %v1506
        %v1533 = vrcp.pop %v1508
        %v1534 = vrcp.pop %v1510
        %v1535 = vrcp.pop %v1512
        %v1536 = vrcp.pop %v1514
        %v1537 = vrcp.pop %v1516
        %v1538 = vrcp.pop %v1518
        %v1539 = vrcp.pop %v1520
        %v1540 = vrcp.pop %v1522
        %v1541 = vrcp.pop %v1524
        %v1542 = vrcp.pop %v1526
        %v1543 = vmul.f32 %v1464, %v1527
        %v1544 = vmul.f32 %v1466, %v1528
        %v1545 = vmul.f32 %v1468, %v1529
        %v1546 = vmul.f32 %v1470, %v1530
        %v1547 = vmul.f32 %v1472, %v1531
        %v1548 = vmul.f32 %v1474, %v1532
        %v1549 = vmul.f32 %v1476, %v1533
        %v1550 = vmul.f32 %v1478, %v1534
        %v1551 = vmul.f32 %v1480, %v1535
        %v1552 = vmul.f32 %v1482, %v1536
        %v1553 = vmul.f32 %v1484, %v1537
        %v1554 = vmul.f32 %v1486, %v1538
        %v1555 = vmul.f32 %v1488, %v1539
        %v1556 = vmul.f32 %v1490, %v1540
        %v1557 = vmul.f32 %v1492, %v1541
        %v1558 = vmul.f32 %v1494, %v1542
        %v1559 = vpack.c.bf16 %v1544, %v1543
        %v1560 = vpack.c.bf16 %v1546, %v1545
        %v1561 = vpack.c.bf16 %v1548, %v1547
        %v1562 = vpack.c.bf16 %v1550, %v1549
        %v1563 = vpack.c.bf16 %v1552, %v1551
        %v1564 = vpack.c.bf16 %v1554, %v1553
        %v1565 = vpack.c.bf16 %v1556, %v1555
        %v1566 = vpack.c.bf16 %v1558, %v1557
        %1575 = vrot.lane.b32.xlu0 %v1261, 64
        %v1576 = vpop.permute.xlu0 %1575
        %1577 = vrot.lane.b32.xlu0 %v1262, 64
        %v1578 = vpop.permute.xlu0 %1577
        %1579 = vrot.lane.b32.xlu0 %v1263, 64
        %v1580 = vpop.permute.xlu0 %1579
        %1581 = vrot.lane.b32.xlu0 %v1264, 64
        %v1582 = vpop.permute.xlu0 %1581
        %1583 = vrot.lane.b32.xlu0 %v1265, 64
        %v1584 = vpop.permute.xlu0 %1583
        %1585 = vrot.lane.b32.xlu0 %v1266, 64
        %v1586 = vpop.permute.xlu0 %1585
        %1587 = vrot.lane.b32.xlu0 %v1267, 64
        %v1588 = vpop.permute.xlu0 %1587
        %1589 = vrot.lane.b32.xlu0 %v1268, 64
        %v1590 = vpop.permute.xlu0 %1589
        %1599 = vmatprep.subr.bf16.mxu0 0
        %1600 = vmatpush1.bf16.msra.mxu0 %v1576
        %1601 = vmatprep.subr.bf16.mxu0 0
        %1602 = vmatpush1.bf16.msra.mxu0 %v1578
        %1603 = vmatprep.subr.bf16.mxu0 0
        %1604 = vmatpush1.bf16.msra.mxu0 %v1580
        %1605 = vmatprep.subr.bf16.mxu0 0
        %1606 = vmatpush1.bf16.msra.mxu0 %v1582
        %1607 = vmatprep.subr.bf16.mxu0 0
        %1608 = vmatpush1.bf16.msra.mxu0 %v1584
        %1609 = vmatprep.subr.bf16.mxu0 0
        %1610 = vmatpush1.bf16.msra.mxu0 %v1586
        %1611 = vmatprep.subr.bf16.mxu0 0
        %1612 = vmatpush1.bf16.msra.mxu0 %v1588
        %1613 = vmatprep.subr.bf16.mxu0 0
        %1614 = vmatpush1.bf16.msra.mxu0 %v1590
        %1615 = vmatprep.subr.bf16.mxu0 0
        %1616 = vmatpush1.bf16.msra.mxu0 0
        %1617 = vmatprep.subr.bf16.mxu0 0
        %1618 = vmatpush1.bf16.msra.mxu0 0
        %1619 = vmatprep.subr.bf16.mxu0 0
        %1620 = vmatpush1.bf16.msra.mxu0 0
        %1621 = vmatprep.subr.bf16.mxu0 0
        %1622 = vmatpush1.bf16.msra.mxu0 0
        %1623 = vmatprep.subr.bf16.mxu0 0
        %1624 = vmatpush1.bf16.msra.mxu0 0
        %1625 = vmatprep.subr.bf16.mxu0 0
        %1626 = vmatpush1.bf16.msra.mxu0 0
        %1627 = vmatprep.subr.bf16.mxu0 0
        %1628 = vmatpush1.bf16.msra.mxu0 0
        %1629 = vmatprep.subr.bf16.mxu0 0
        %1630 = vmatpush1.bf16.msra.mxu0 0
        %1631 = vmatprep.mubr.bf16.mxu0 0
        %1632 = vmatmul.mubr.bf16.gmra.mrb[0].mxu0 %v1559
        %v1633 = vpop.f32.mrb[0].mxu0
        %v1634 = vadd.f32 0.0, %v1633
        %v1635 = vpop.f32.mrb[0].mxu0
        %v1636 = vpop.f32.mrb[0].mxu0
        %v1637 = vadd.f32 0.0, %v1636
        %v1638 = vpop.f32.mrb[0].mxu0
        %1639 = vmatprep.mubr.bf16.mxu0 0
        %1640 = vmatmul.mubr.bf16.gmra.mrb[0].mxu0 %v1560
        %v1641 = vpop.f32.mrb[0].mxu0
        %v1642 = vadd.f32 0.0, %v1641
        %v1643 = vpop.f32.mrb[0].mxu0
        %v1644 = vpop.f32.mrb[0].mxu0
        %v1645 = vadd.f32 0.0, %v1644
        %v1646 = vpop.f32.mrb[0].mxu0
        %1647 = vmatprep.mubr.bf16.mxu0 0
        %1648 = vmatmul.mubr.bf16.gmra.mrb[0].mxu0 %v1561
        %v1649 = vpop.f32.mrb[0].mxu0
        %v1650 = vadd.f32 0.0, %v1649
        %v1651 = vpop.f32.mrb[0].mxu0
        %v1652 = vpop.f32.mrb[0].mxu0
        %v1653 = vadd.f32 0.0, %v1652
        %v1654 = vpop.f32.mrb[0].mxu0
        %1655 = vmatprep.mubr.bf16.mxu0 0
        %1656 = vmatmul.mubr.bf16.gmra.mrb[0].mxu0 %v1562
        %v1657 = vpop.f32.mrb[0].mxu0
        %v1658 = vadd.f32 0.0, %v1657
        %v1659 = vpop.f32.mrb[0].mxu0
        %v1660 = vpop.f32.mrb[0].mxu0
        %v1661 = vadd.f32 0.0, %v1660
        %v1662 = vpop.f32.mrb[0].mxu0
        %1663 = vmatprep.mubr.bf16.mxu0 0
        %1664 = vmatmul.mubr.bf16.gmra.mrb[0].mxu0 %v1563
        %v1665 = vpop.f32.mrb[0].mxu0
        %v1666 = vadd.f32 0.0, %v1665
        %v1667 = vpop.f32.mrb[0].mxu0
        %v1668 = vpop.f32.mrb[0].mxu0
        %v1669 = vadd.f32 0.0, %v1668
        %v1670 = vpop.f32.mrb[0].mxu0
        %1671 = vmatprep.mubr.bf16.mxu0 0
        %1672 = vmatmul.mubr.bf16.gmra.mrb[0].mxu0 %v1564
        %v1673 = vpop.f32.mrb[0].mxu0
        %v1674 = vadd.f32 0.0, %v1673
        %v1675 = vpop.f32.mrb[0].mxu0
        %v1676 = vpop.f32.mrb[0].mxu0
        %v1677 = vadd.f32 0.0, %v1676
        %v1678 = vpop.f32.mrb[0].mxu0
        %1679 = vmatprep.mubr.bf16.mxu0 0
        %1680 = vmatmul.mubr.bf16.gmra.mrb[0].mxu0 %v1565
        %v1681 = vpop.f32.mrb[0].mxu0
        %v1682 = vadd.f32 0.0, %v1681
        %v1683 = vpop.f32.mrb[0].mxu0
        %v1684 = vpop.f32.mrb[0].mxu0
        %v1685 = vadd.f32 0.0, %v1684
        %v1686 = vpop.f32.mrb[0].mxu0
        %1687 = vmatprep.mubr.bf16.mxu0 0
        %1688 = vmatmul.mubr.bf16.gmra.mrb[0].mxu0 %v1566
        %v1689 = vpop.f32.mrb[0].mxu0
        %v1690 = vadd.f32 0.0, %v1689
        %v1691 = vpop.f32.mrb[0].mxu0
        %v1692 = vpop.f32.mrb[0].mxu0
        %v1693 = vadd.f32 0.0, %v1692
        %v1694 = vpop.f32.mrb[0].mxu0
        %1695 = vdwg.mxu0
        %v1696 = vpack.c.bf16 %v1637, %v1634
        %v1697 = vpack.c.bf16 %v1645, %v1642
        %v1698 = vpack.c.bf16 %v1653, %v1650
        %v1699 = vpack.c.bf16 %v1661, %v1658
        %v1700 = vpack.c.bf16 %v1669, %v1666
        %v1701 = vpack.c.bf16 %v1677, %v1674
        %v1702 = vpack.c.bf16 %v1685, %v1682
        %v1703 = vpack.c.bf16 %v1693, %v1690
        %v1704 = vpack.c.bf16 %v1165, %v1161
        %v1705 = vpack.c.bf16 %v1175, %v1171
        %v1706 = vpack.c.bf16 %v1185, %v1181
        %v1707 = vpack.c.bf16 %v1195, %v1191
        %v1708 = vpack.c.bf16 %v1205, %v1201
        %v1709 = vpack.c.bf16 %v1215, %v1211
        %v1710 = vpack.c.bf16 %v1225, %v1221
        %v1711 = vpack.c.bf16 %v1235, %v1231
        %1720 = vrot.lane.b32.xlu0 %v1253, 64
        %v1721 = vpop.permute.xlu0 %1720
        %1722 = vrot.lane.b32.xlu0 %v1254, 64
        %v1723 = vpop.permute.xlu0 %1722
        %1724 = vrot.lane.b32.xlu0 %v1255, 64
        %v1725 = vpop.permute.xlu0 %1724
        %1726 = vrot.lane.b32.xlu0 %v1256, 64
        %v1727 = vpop.permute.xlu0 %1726
        %1728 = vrot.lane.b32.xlu0 %v1257, 64
        %v1729 = vpop.permute.xlu0 %1728
        %1730 = vrot.lane.b32.xlu0 %v1258, 64
        %v1731 = vpop.permute.xlu0 %1730
        %1732 = vrot.lane.b32.xlu0 %v1259, 64
        %v1733 = vpop.permute.xlu0 %1732
        %1734 = vrot.lane.b32.xlu0 %v1260, 64
        %v1735 = vpop.permute.xlu0 %1734
        %v1737 = vsel %vm1269, %v1721, 0
        %v1740 = vsel %vm1269, %v1723, 0
        %v1743 = vsel %vm1269, %v1725, 0
        %v1746 = vsel %vm1269, %v1727, 0
        %v1749 = vsel %vm1269, %v1729, 0
        %v1752 = vsel %vm1269, %v1731, 0
        %v1755 = vsel %vm1269, %v1733, 0
        %v1758 = vsel %vm1269, %v1735, 0
        %v1761 = vsel %vm1269, %v1704, 0
        %v1764 = vsel %vm1269, %v1705, 0
        %v1767 = vsel %vm1269, %v1706, 0
        %v1770 = vsel %vm1269, %v1707, 0
        %v1773 = vsel %vm1269, %v1708, 0
        %v1776 = vsel %vm1269, %v1709, 0
        %v1779 = vsel %vm1269, %v1710, 0
        %v1782 = vsel %vm1269, %v1711, 0
        %1784 = vmatprep.subr.bf16.mxu0 0
        %1785 = vmatpush1.bf16.xpose.msra.mxu0 %v1761
        %1786 = vmatprep.subr.bf16.mxu0 0
        %1787 = vmatpush1.bf16.xpose.msra.mxu0 %v1764
        %1788 = vmatprep.subr.bf16.mxu0 0
        %1789 = vmatpush1.bf16.xpose.msra.mxu0 %v1767
        %1790 = vmatprep.subr.bf16.mxu0 0
        %1791 = vmatpush1.bf16.xpose.msra.mxu0 %v1770
        %1792 = vmatprep.subr.bf16.mxu0 0
        %1793 = vmatpush1.bf16.xpose.msra.mxu0 %v1773
        %1794 = vmatprep.subr.bf16.mxu0 0
        %1795 = vmatpush1.bf16.xpose.msra.mxu0 %v1776
        %1796 = vmatprep.subr.bf16.mxu0 0
        %1797 = vmatpush1.bf16.xpose.msra.mxu0 %v1779
        %1798 = vmatprep.subr.bf16.mxu0 0
        %1799 = vmatpush1.bf16.xpose.msra.mxu0 %v1782
        %1800 = vmatprep.subr.bf16.mxu0 0
        %1801 = vmatpush1.bf16.xpose.msra.mxu0 0
        %1802 = vmatprep.subr.bf16.mxu0 0
        %1803 = vmatpush1.bf16.xpose.msra.mxu0 0
        %1804 = vmatprep.subr.bf16.mxu0 0
        %1805 = vmatpush1.bf16.xpose.msra.mxu0 0
        %1806 = vmatprep.subr.bf16.mxu0 0
        %1807 = vmatpush1.bf16.xpose.msra.mxu0 0
        %1808 = vmatprep.subr.bf16.mxu0 0
        %1809 = vmatpush1.bf16.xpose.msra.mxu0 0
        %1810 = vmatprep.subr.bf16.mxu0 0
        %1811 = vmatpush1.bf16.xpose.msra.mxu0 0
        %1812 = vmatprep.subr.bf16.mxu0 0
        %1813 = vmatpush1.bf16.xpose.msra.mxu0 0
        %1814 = vmatprep.subr.bf16.mxu0 0
        %1815 = vmatpush1.bf16.xpose.msra.mxu0 0
        %1816 = vmatprep.mubr.bf16.mxu0 0
        %1817 = vmatmul.mubr.bf16.gmra.mrb[0].mxu0 %v1737
        %v1818 = vpop.f32.mrb[0].mxu0
        %v1819 = vadd.f32 0.0, %v1818
        %v1820 = vpop.f32.mrb[0].mxu0
        %v1821 = vpop.f32.mrb[0].mxu0
        %v1822 = vadd.f32 0.0, %v1821
        %v1823 = vpop.f32.mrb[0].mxu0
        %1824 = vmatprep.mubr.bf16.mxu0 0
        %1825 = vmatmul.mubr.bf16.gmra.mrb[0].mxu0 %v1740
        %v1826 = vpop.f32.mrb[0].mxu0
        %v1827 = vadd.f32 0.0, %v1826
        %v1828 = vpop.f32.mrb[0].mxu0
        %v1829 = vpop.f32.mrb[0].mxu0
        %v1830 = vadd.f32 0.0, %v1829
        %v1831 = vpop.f32.mrb[0].mxu0
        %1832 = vmatprep.mubr.bf16.mxu0 0
        %1833 = vmatmul.mubr.bf16.gmra.mrb[0].mxu0 %v1743
        %v1834 = vpop.f32.mrb[0].mxu0
        %v1835 = vadd.f32 0.0, %v1834
        %v1836 = vpop.f32.mrb[0].mxu0
        %v1837 = vpop.f32.mrb[0].mxu0
        %v1838 = vadd.f32 0.0, %v1837
        %v1839 = vpop.f32.mrb[0].mxu0
        %1840 = vmatprep.mubr.bf16.mxu0 0
        %1841 = vmatmul.mubr.bf16.gmra.mrb[0].mxu0 %v1746
        %v1842 = vpop.f32.mrb[0].mxu0
        %v1843 = vadd.f32 0.0, %v1842
        %v1844 = vpop.f32.mrb[0].mxu0
        %v1845 = vpop.f32.mrb[0].mxu0
        %v1846 = vadd.f32 0.0, %v1845
        %v1847 = vpop.f32.mrb[0].mxu0
        %1848 = vmatprep.mubr.bf16.mxu0 0
        %1849 = vmatmul.mubr.bf16.gmra.mrb[0].mxu0 %v1749
        %v1850 = vpop.f32.mrb[0].mxu0
        %v1851 = vadd.f32 0.0, %v1850
        %v1852 = vpop.f32.mrb[0].mxu0
        %v1853 = vpop.f32.mrb[0].mxu0
        %v1854 = vadd.f32 0.0, %v1853
        %v1855 = vpop.f32.mrb[0].mxu0
        %1856 = vmatprep.mubr.bf16.mxu0 0
        %1857 = vmatmul.mubr.bf16.gmra.mrb[0].mxu0 %v1752
        %v1858 = vpop.f32.mrb[0].mxu0
        %v1859 = vadd.f32 0.0, %v1858
        %v1860 = vpop.f32.mrb[0].mxu0
        %v1861 = vpop.f32.mrb[0].mxu0
        %v1862 = vadd.f32 0.0, %v1861
        %v1863 = vpop.f32.mrb[0].mxu0
        %1864 = vmatprep.mubr.bf16.mxu0 0
        %1865 = vmatmul.mubr.bf16.gmra.mrb[0].mxu0 %v1755
        %v1866 = vpop.f32.mrb[0].mxu0
        %v1867 = vadd.f32 0.0, %v1866
        %v1868 = vpop.f32.mrb[0].mxu0
        %v1869 = vpop.f32.mrb[0].mxu0
        %v1870 = vadd.f32 0.0, %v1869
        %v1871 = vpop.f32.mrb[0].mxu0
        %1872 = vmatprep.mubr.bf16.mxu0 0
        %1873 = vmatmul.mubr.bf16.gmra.mrb[0].mxu0 %v1758
        %v1874 = vpop.f32.mrb[0].mxu0
        %v1875 = vadd.f32 0.0, %v1874
        %v1876 = vpop.f32.mrb[0].mxu0
        %v1877 = vpop.f32.mrb[0].mxu0
        %v1878 = vadd.f32 0.0, %v1877
        %v1879 = vpop.f32.mrb[0].mxu0
        %1880 = vdwg.mxu0
        %1881 = vmax.xlane.f32.xlu0 %v1819
        %v1882 = vpop.xlane.xlu0 %1881
        %1883 = vmax.xlane.f32.xlu0 %v1822
        %v1884 = vpop.xlane.xlu0 %1883
        %1885 = vmax.xlane.f32.xlu0 %v1827
        %v1886 = vpop.xlane.xlu0 %1885
        %1887 = vmax.xlane.f32.xlu0 %v1830
        %v1888 = vpop.xlane.xlu0 %1887
        %1889 = vmax.xlane.f32.xlu0 %v1835
        %v1890 = vpop.xlane.xlu0 %1889
        %1891 = vmax.xlane.f32.xlu0 %v1838
        %v1892 = vpop.xlane.xlu0 %1891
        %1893 = vmax.xlane.f32.xlu0 %v1843
        %v1894 = vpop.xlane.xlu0 %1893
        %1895 = vmax.xlane.f32.xlu0 %v1846
        %v1896 = vpop.xlane.xlu0 %1895
        %1897 = vmax.xlane.f32.xlu0 %v1851
        %v1898 = vpop.xlane.xlu0 %1897
        %1899 = vmax.xlane.f32.xlu0 %v1854
        %v1900 = vpop.xlane.xlu0 %1899
        %1901 = vmax.xlane.f32.xlu0 %v1859
        %v1902 = vpop.xlane.xlu0 %1901
        %1903 = vmax.xlane.f32.xlu0 %v1862
        %v1904 = vpop.xlane.xlu0 %1903
        %1905 = vmax.xlane.f32.xlu0 %v1867
        %v1906 = vpop.xlane.xlu0 %1905
        %1907 = vmax.xlane.f32.xlu0 %v1870
        %v1908 = vpop.xlane.xlu0 %1907
        %1909 = vmax.xlane.f32.xlu0 %v1875
        %v1910 = vpop.xlane.xlu0 %1909
        %1911 = vmax.xlane.f32.xlu0 %v1878
        %v1912 = vpop.xlane.xlu0 %1911
        %v1913 = vsub.f32 %v1819, %v1882
        %v1914 = vsub.f32 %v1822, %v1884
        %v1915 = vsub.f32 %v1827, %v1886
        %v1916 = vsub.f32 %v1830, %v1888
        %v1917 = vsub.f32 %v1835, %v1890
        %v1918 = vsub.f32 %v1838, %v1892
        %v1919 = vsub.f32 %v1843, %v1894
        %v1920 = vsub.f32 %v1846, %v1896
        %v1921 = vsub.f32 %v1851, %v1898
        %v1922 = vsub.f32 %v1854, %v1900
        %v1923 = vsub.f32 %v1859, %v1902
        %v1924 = vsub.f32 %v1862, %v1904
        %v1925 = vsub.f32 %v1867, %v1906
        %v1926 = vsub.f32 %v1870, %v1908
        %v1927 = vsub.f32 %v1875, %v1910
        %v1928 = vsub.f32 %v1878, %v1912
        %v1929 = vmul.f32 %v1913, 1.442695
        %v1930 = vpow.pop %v1929
        %v1931 = vmul.f32 %v1914, 1.442695
        %v1932 = vpow.pop %v1931
        %v1933 = vmul.f32 %v1915, 1.442695
        %v1934 = vpow.pop %v1933
        %v1935 = vmul.f32 %v1916, 1.442695
        %v1936 = vpow.pop %v1935
        %v1937 = vmul.f32 %v1917, 1.442695
        %v1938 = vpow.pop %v1937
        %v1939 = vmul.f32 %v1918, 1.442695
        %v1940 = vpow.pop %v1939
        %v1941 = vmul.f32 %v1919, 1.442695
        %v1942 = vpow.pop %v1941
        %v1943 = vmul.f32 %v1920, 1.442695
        %v1944 = vpow.pop %v1943
        %v1945 = vmul.f32 %v1921, 1.442695
        %v1946 = vpow.pop %v1945
        %v1947 = vmul.f32 %v1922, 1.442695
        %v1948 = vpow.pop %v1947
        %v1949 = vmul.f32 %v1923, 1.442695
        %v1950 = vpow.pop %v1949
        %v1951 = vmul.f32 %v1924, 1.442695
        %v1952 = vpow.pop %v1951
        %v1953 = vmul.f32 %v1925, 1.442695
        %v1954 = vpow.pop %v1953
        %v1955 = vmul.f32 %v1926, 1.442695
        %v1956 = vpow.pop %v1955
        %v1957 = vmul.f32 %v1927, 1.442695
        %v1958 = vpow.pop %v1957
        %v1959 = vmul.f32 %v1928, 1.442695
        %v1960 = vpow.pop %v1959
        %1961 = vadd.xlane.f32.xlu0 %v1930
        %v1962 = vpop.xlane.xlu0 %1961
        %1963 = vadd.xlane.f32.xlu0 %v1932
        %v1964 = vpop.xlane.xlu0 %1963
        %1965 = vadd.xlane.f32.xlu0 %v1934
        %v1966 = vpop.xlane.xlu0 %1965
        %1967 = vadd.xlane.f32.xlu0 %v1936
        %v1968 = vpop.xlane.xlu0 %1967
        %1969 = vadd.xlane.f32.xlu0 %v1938
        %v1970 = vpop.xlane.xlu0 %1969
        %1971 = vadd.xlane.f32.xlu0 %v1940
        %v1972 = vpop.xlane.xlu0 %1971
        %1973 = vadd.xlane.f32.xlu0 %v1942
        %v1974 = vpop.xlane.xlu0 %1973
        %1975 = vadd.xlane.f32.xlu0 %v1944
        %v1976 = vpop.xlane.xlu0 %1975
        %1977 = vadd.xlane.f32.xlu0 %v1946
        %v1978 = vpop.xlane.xlu0 %1977
        %1979 = vadd.xlane.f32.xlu0 %v1948
        %v1980 = vpop.xlane.xlu0 %1979
        %1981 = vadd.xlane.f32.xlu0 %v1950
        %v1982 = vpop.xlane.xlu0 %1981
        %1983 = vadd.xlane.f32.xlu0 %v1952
        %v1984 = vpop.xlane.xlu0 %1983
        %1985 = vadd.xlane.f32.xlu0 %v1954
        %v1986 = vpop.xlane.xlu0 %1985
        %1987 = vadd.xlane.f32.xlu0 %v1956
        %v1988 = vpop.xlane.xlu0 %1987
        %1989 = vadd.xlane.f32.xlu0 %v1958
        %v1990 = vpop.xlane.xlu0 %1989
        %1991 = vadd.xlane.f32.xlu0 %v1960
        %v1992 = vpop.xlane.xlu0 %1991
        %v1993 = vrcp.pop %v1962
        %v1994 = vrcp.pop %v1964
        %v1995 = vrcp.pop %v1966
        %v1996 = vrcp.pop %v1968
        %v1997 = vrcp.pop %v1970
        %v1998 = vrcp.pop %v1972
        %v1999 = vrcp.pop %v1974
        %v2000 = vrcp.pop %v1976
        %v2001 = vrcp.pop %v1978
        %v2002 = vrcp.pop %v1980
        %v2003 = vrcp.pop %v1982
        %v2004 = vrcp.pop %v1984
        %v2005 = vrcp.pop %v1986
        %v2006 = vrcp.pop %v1988
        %v2007 = vrcp.pop %v1990
        %v2008 = vrcp.pop %v1992
        %v2009 = vmul.f32 %v1930, %v1993
        %v2010 = vmul.f32 %v1932, %v1994
        %v2011 = vmul.f32 %v1934, %v1995
        %v2012 = vmul.f32 %v1936, %v1996
        %v2013 = vmul.f32 %v1938, %v1997
        %v2014 = vmul.f32 %v1940, %v1998
        %v2015 = vmul.f32 %v1942, %v1999
        %v2016 = vmul.f32 %v1944, %v2000
        %v2017 = vmul.f32 %v1946, %v2001
        %v2018 = vmul.f32 %v1948, %v2002
        %v2019 = vmul.f32 %v1950, %v2003
        %v2020 = vmul.f32 %v1952, %v2004
        %v2021 = vmul.f32 %v1954, %v2005
        %v2022 = vmul.f32 %v1956, %v2006
        %v2023 = vmul.f32 %v1958, %v2007
        %v2024 = vmul.f32 %v1960, %v2008
        %v2025 = vpack.c.bf16 %v2010, %v2009
        %v2026 = vpack.c.bf16 %v2012, %v2011
        %v2027 = vpack.c.bf16 %v2014, %v2013
        %v2028 = vpack.c.bf16 %v2016, %v2015
        %v2029 = vpack.c.bf16 %v2018, %v2017
        %v2030 = vpack.c.bf16 %v2020, %v2019
        %v2031 = vpack.c.bf16 %v2022, %v2021
        %v2032 = vpack.c.bf16 %v2024, %v2023
        %2041 = vrot.lane.b32.xlu0 %v1704, 64
        %v2042 = vpop.permute.xlu0 %2041
        %2043 = vrot.lane.b32.xlu0 %v1705, 64
        %v2044 = vpop.permute.xlu0 %2043
        %2045 = vrot.lane.b32.xlu0 %v1706, 64
        %v2046 = vpop.permute.xlu0 %2045
        %2047 = vrot.lane.b32.xlu0 %v1707, 64
        %v2048 = vpop.permute.xlu0 %2047
        %2049 = vrot.lane.b32.xlu0 %v1708, 64
        %v2050 = vpop.permute.xlu0 %2049
        %2051 = vrot.lane.b32.xlu0 %v1709, 64
        %v2052 = vpop.permute.xlu0 %2051
        %2053 = vrot.lane.b32.xlu0 %v1710, 64
        %v2054 = vpop.permute.xlu0 %2053
        %2055 = vrot.lane.b32.xlu0 %v1711, 64
        %v2056 = vpop.permute.xlu0 %2055
        %2065 = vmatprep.subr.bf16.mxu0 0
        %2066 = vmatpush1.bf16.msra.mxu0 %v2042
        %2067 = vmatprep.subr.bf16.mxu0 0
        %2068 = vmatpush1.bf16.msra.mxu0 %v2044
        %2069 = vmatprep.subr.bf16.mxu0 0
        %2070 = vmatpush1.bf16.msra.mxu0 %v2046
        %2071 = vmatprep.subr.bf16.mxu0 0
        %2072 = vmatpush1.bf16.msra.mxu0 %v2048
        %2073 = vmatprep.subr.bf16.mxu0 0
        %2074 = vmatpush1.bf16.msra.mxu0 %v2050
        %2075 = vmatprep.subr.bf16.mxu0 0
        %2076 = vmatpush1.bf16.msra.mxu0 %v2052
        %2077 = vmatprep.subr.bf16.mxu0 0
        %2078 = vmatpush1.bf16.msra.mxu0 %v2054
        %2079 = vmatprep.subr.bf16.mxu0 0
        %2080 = vmatpush1.bf16.msra.mxu0 %v2056
        %2081 = vmatprep.subr.bf16.mxu0 0
        %2082 = vmatpush1.bf16.msra.mxu0 0
        %2083 = vmatprep.subr.bf16.mxu0 0
        %2084 = vmatpush1.bf16.msra.mxu0 0
        %2085 = vmatprep.subr.bf16.mxu0 0
        %2086 = vmatpush1.bf16.msra.mxu0 0
        %2087 = vmatprep.subr.bf16.mxu0 0
        %2088 = vmatpush1.bf16.msra.mxu0 0
        %2089 = vmatprep.subr.bf16.mxu0 0
        %2090 = vmatpush1.bf16.msra.mxu0 0
        %2091 = vmatprep.subr.bf16.mxu0 0
        %2092 = vmatpush1.bf16.msra.mxu0 0
        %2093 = vmatprep.subr.bf16.mxu0 0
        %2094 = vmatpush1.bf16.msra.mxu0 0
        %2095 = vmatprep.subr.bf16.mxu0 0
        %2096 = vmatpush1.bf16.msra.mxu0 0
        %2097 = vmatprep.mubr.bf16.mxu0 0
        %2098 = vmatmul.mubr.bf16.gmra.mrb[0].mxu0 %v2025
        %v2099 = vpop.f32.mrb[0].mxu0
        %v2100 = vadd.f32 0.0, %v2099
        %v2101 = vpop.f32.mrb[0].mxu0
        %v2102 = vpop.f32.mrb[0].mxu0
        %v2103 = vadd.f32 0.0, %v2102
        %v2104 = vpop.f32.mrb[0].mxu0
        %2105 = vmatprep.mubr.bf16.mxu0 0
        %2106 = vmatmul.mubr.bf16.gmra.mrb[0].mxu0 %v2026
        %v2107 = vpop.f32.mrb[0].mxu0
        %v2108 = vadd.f32 0.0, %v2107
        %v2109 = vpop.f32.mrb[0].mxu0
        %v2110 = vpop.f32.mrb[0].mxu0
        %v2111 = vadd.f32 0.0, %v2110
        %v2112 = vpop.f32.mrb[0].mxu0
        %2113 = vmatprep.mubr.bf16.mxu0 0
        %2114 = vmatmul.mubr.bf16.gmra.mrb[0].mxu0 %v2027
        %v2115 = vpop.f32.mrb[0].mxu0
        %v2116 = vadd.f32 0.0, %v2115
        %v2117 = vpop.f32.mrb[0].mxu0
        %v2118 = vpop.f32.mrb[0].mxu0
        %v2119 = vadd.f32 0.0, %v2118
        %v2120 = vpop.f32.mrb[0].mxu0
        %2121 = vmatprep.mubr.bf16.mxu0 0
        %2122 = vmatmul.mubr.bf16.gmra.mrb[0].mxu0 %v2028
        %v2123 = vpop.f32.mrb[0].mxu0
        %v2124 = vadd.f32 0.0, %v2123
        %v2125 = vpop.f32.mrb[0].mxu0
        %v2126 = vpop.f32.mrb[0].mxu0
        %v2127 = vadd.f32 0.0, %v2126
        %v2128 = vpop.f32.mrb[0].mxu0
        %2129 = vmatprep.mubr.bf16.mxu0 0
        %2130 = vmatmul.mubr.bf16.gmra.mrb[0].mxu0 %v2029
        %v2131 = vpop.f32.mrb[0].mxu0
        %v2132 = vadd.f32 0.0, %v2131
        %v2133 = vpop.f32.mrb[0].mxu0
        %v2134 = vpop.f32.mrb[0].mxu0
        %v2135 = vadd.f32 0.0, %v2134
        %v2136 = vpop.f32.mrb[0].mxu0
        %2137 = vmatprep.mubr.bf16.mxu0 0
        %2138 = vmatmul.mubr.bf16.gmra.mrb[0].mxu0 %v2030
        %v2139 = vpop.f32.mrb[0].mxu0
        %v2140 = vadd.f32 0.0, %v2139
        %v2141 = vpop.f32.mrb[0].mxu0
        %v2142 = vpop.f32.mrb[0].mxu0
        %v2143 = vadd.f32 0.0, %v2142
        %v2144 = vpop.f32.mrb[0].mxu0
        %2145 = vmatprep.mubr.bf16.mxu0 0
        %2146 = vmatmul.mubr.bf16.gmra.mrb[0].mxu0 %v2031
        %v2147 = vpop.f32.mrb[0].mxu0
        %v2148 = vadd.f32 0.0, %v2147
        %v2149 = vpop.f32.mrb[0].mxu0
        %v2150 = vpop.f32.mrb[0].mxu0
        %v2151 = vadd.f32 0.0, %v2150
        %v2152 = vpop.f32.mrb[0].mxu0
        %2153 = vmatprep.mubr.bf16.mxu0 0
        %2154 = vmatmul.mubr.bf16.gmra.mrb[0].mxu0 %v2032
        %v2155 = vpop.f32.mrb[0].mxu0
        %v2156 = vadd.f32 0.0, %v2155
        %v2157 = vpop.f32.mrb[0].mxu0
        %v2158 = vpop.f32.mrb[0].mxu0
        %v2159 = vadd.f32 0.0, %v2158
        %v2160 = vpop.f32.mrb[0].mxu0
        %2161 = vdwg.mxu0
        %v2162 = vpack.c.bf16 %v2103, %v2100
        %v2163 = vpack.c.bf16 %v2111, %v2108
        %v2164 = vpack.c.bf16 %v2119, %v2116
        %v2165 = vpack.c.bf16 %v2127, %v2124
        %v2166 = vpack.c.bf16 %v2135, %v2132
        %v2167 = vpack.c.bf16 %v2143, %v2140
        %v2168 = vpack.c.bf16 %v2151, %v2148
        %v2169 = vpack.c.bf16 %v2159, %v2156
        %2178 = vrot.lane.b32.xlu0 %v2162, 64
        %v2179 = vpop.permute.xlu0 %2178
        %2180 = vrot.lane.b32.xlu0 %v2163, 64
        %v2181 = vpop.permute.xlu0 %2180
        %2182 = vrot.lane.b32.xlu0 %v2164, 64
        %v2183 = vpop.permute.xlu0 %2182
        %2184 = vrot.lane.b32.xlu0 %v2165, 64
        %v2185 = vpop.permute.xlu0 %2184
        %2186 = vrot.lane.b32.xlu0 %v2166, 64
        %v2187 = vpop.permute.xlu0 %2186
        %2188 = vrot.lane.b32.xlu0 %v2167, 64
        %v2189 = vpop.permute.xlu0 %2188
        %2190 = vrot.lane.b32.xlu0 %v2168, 64
        %v2191 = vpop.permute.xlu0 %2190
        %2192 = vrot.lane.b32.xlu0 %v2169, 64
        %v2193 = vpop.permute.xlu0 %2192
        %v2196 = vsel %vm1269, %v1696, %v2179
        %v2200 = vsel %vm1269, %v1697, %v2181
        %v2204 = vsel %vm1269, %v1698, %v2183
        %v2208 = vsel %vm1269, %v1699, %v2185
        %v2212 = vsel %vm1269, %v1700, %v2187
        %v2216 = vsel %vm1269, %v1701, %v2189
        %v2220 = vsel %vm1269, %v1702, %v2191
        %v2224 = vsel %vm1269, %v1703, %v2193
        %s2226 = smul.u32 %s35, 128
        %s2227 = sshra.s32 %s2226, 7
        %s2228 = sand.u32 %s2226, 127
        %s2229 = smul.addr %s2227, 8
        %s2230 = scalar_lea.vmem [#allocation2], %s2229
        %2231 = vst [vmem:[%s2230] sm:$0xff] %v2196
        %2232 = vst [vmem:[%s2230 + $0x10] sm:$0xff] %v2200
        %2233 = vst [vmem:[%s2230 + $0x20] sm:$0xff] %v2204
        %2234 = vst [vmem:[%s2230 + $0x30] sm:$0xff] %v2208
        %2235 = vst [vmem:[%s2230 + $0x40] sm:$0xff] %v2212
        %2236 = vst [vmem:[%s2230 + $0x50] sm:$0xff] %v2216
        %2237 = vst [vmem:[%s2230 + $0x60] sm:$0xff] %v2220
        %2238 = vst [vmem:[%s2230 + $0x70] sm:$0xff] %v2224
        %p2239 = scmp.eq.s32.totalorder %s35, 1
        // Predicated region
        $region77: #{tpu_custom_call.1} parent=47 // pred_check
          %p2240 = pneg %p2239
        $region78: #{tpu_custom_call.1} parent=47 // pred_check_branch
          %2242 = sbr.rel (%p2240) target = $region80
        $region79: #{tpu_custom_call.1} parent=47 // pred_region
          %v2243 = vld [vmem:[#allocation2] sm:$0xff]
          %v2244 = vld [vmem:[#allocation2 + $0x8] sm:$0xff]
          %v2245 = vld [vmem:[#allocation2 + $0x10] sm:$0xff]
          %v2246 = vld [vmem:[#allocation2 + $0x18] sm:$0xff]
          %v2247 = vld [vmem:[#allocation2 + $0x20] sm:$0xff]
          %v2248 = vld [vmem:[#allocation2 + $0x28] sm:$0xff]
          %v2249 = vld [vmem:[#allocation2 + $0x30] sm:$0xff]
          %v2250 = vld [vmem:[#allocation2 + $0x38] sm:$0xff]
          %v2251 = vld [vmem:[#allocation2 + $0x40] sm:$0xff]
          %v2252 = vld [vmem:[#allocation2 + $0x48] sm:$0xff]
          %v2253 = vld [vmem:[#allocation2 + $0x50] sm:$0xff]
          %v2254 = vld [vmem:[#allocation2 + $0x58] sm:$0xff]
          %v2255 = vld [vmem:[#allocation2 + $0x60] sm:$0xff]
          %v2256 = vld [vmem:[#allocation2 + $0x68] sm:$0xff]
          %v2257 = vld [vmem:[#allocation2 + $0x70] sm:$0xff]
          %v2258 = vld [vmem:[#allocation2 + $0x78] sm:$0xff]
          %v2259 = vld [vmem:[#allocation9] sm:$0xff]
          %v2260 = vld [vmem:[#allocation9 + $0x8] sm:$0xff]
          %v2261 = vld [vmem:[#allocation9 + $0x10] sm:$0xff]
          %v2262 = vld [vmem:[#allocation9 + $0x18] sm:$0xff]
          %v2263 = vld [vmem:[#allocation9 + $0x20] sm:$0xff]
          %v2264 = vld [vmem:[#allocation9 + $0x28] sm:$0xff]
          %v2265 = vld [vmem:[#allocation9 + $0x30] sm:$0xff]
          %v2266 = vld [vmem:[#allocation9 + $0x38] sm:$0xff]
          %v2267 = vld [vmem:[#allocation9 + $0x40] sm:$0xff]
          %v2268 = vld [vmem:[#allocation9 + $0x48] sm:$0xff]
          %v2269 = vld [vmem:[#allocation9 + $0x50] sm:$0xff]
          %v2270 = vld [vmem:[#allocation9 + $0x58] sm:$0xff]
          %v2271 = vld [vmem:[#allocation9 + $0x60] sm:$0xff]
          %v2272 = vld [vmem:[#allocation9 + $0x68] sm:$0xff]
          %v2273 = vld [vmem:[#allocation9 + $0x70] sm:$0xff]
          %v2274 = vld [vmem:[#allocation9 + $0x78] sm:$0xff]
          %v2275 = vld [vmem:[#allocation9 + $0x80] sm:$0xff]
          %v2276 = vld [vmem:[#allocation9 + $0x88] sm:$0xff]
          %v2277 = vld [vmem:[#allocation9 + $0x90] sm:$0xff]
          %v2278 = vld [vmem:[#allocation9 + $0x98] sm:$0xff]
          %v2279 = vld [vmem:[#allocation9 + $0xa0] sm:$0xff]
          %v2280 = vld [vmem:[#allocation9 + $0xa8] sm:$0xff]
          %v2281 = vld [vmem:[#allocation9 + $0xb0] sm:$0xff]
          %v2282 = vld [vmem:[#allocation9 + $0xb8] sm:$0xff]
          %v2283 = vld [vmem:[#allocation9 + $0xc0] sm:$0xff]
          %v2284 = vld [vmem:[#allocation9 + $0xc8] sm:$0xff]
          %v2285 = vld [vmem:[#allocation9 + $0xd0] sm:$0xff]
          %v2286 = vld [vmem:[#allocation9 + $0xd8] sm:$0xff]
          %v2287 = vld [vmem:[#allocation9 + $0xe0] sm:$0xff]
          %v2288 = vld [vmem:[#allocation9 + $0xe8] sm:$0xff]
          %v2289 = vld [vmem:[#allocation9 + $0xf0] sm:$0xff]
          %v2290 = vld [vmem:[#allocation9 + $0xf8] sm:$0xff]
          %v2291 = vld [vmem:[#allocation13] sm:$0x3]
          %v2293 = vlaneseq
          %v2294 = vshrl.u32 %v2293, 7
          %v2295 = vsub.s32 0, %v2294
          %v2296 = vrot.slane %v2291, %v2295
          %v2297 = vlaneseq
          %v2298 = vshrl.u32 %v2297, 7
          %v2299 = vsub.s32 1, %v2298
          %v2300 = vrot.slane %v2291, %v2299
          %v2335 = vunpack.c.l.b16 %v2259
          %v2336 = vunpack.c.h.b16 %v2259
          %v2337 = vunpack.c.l.b16 %v2260
          %v2338 = vunpack.c.h.b16 %v2260
          %v2339 = vunpack.c.l.b16 %v2261
          %v2340 = vunpack.c.h.b16 %v2261
          %v2341 = vunpack.c.l.b16 %v2262
          %v2342 = vunpack.c.h.b16 %v2262
          %v2343 = vunpack.c.l.b16 %v2263
          %v2344 = vunpack.c.h.b16 %v2263
          %v2345 = vunpack.c.l.b16 %v2264
          %v2346 = vunpack.c.h.b16 %v2264
          %v2347 = vunpack.c.l.b16 %v2265
          %v2348 = vunpack.c.h.b16 %v2265
          %v2349 = vunpack.c.l.b16 %v2266
          %v2350 = vunpack.c.h.b16 %v2266
          %v2351 = vunpack.c.l.b16 %v2267
          %v2352 = vunpack.c.h.b16 %v2267
          %v2353 = vunpack.c.l.b16 %v2268
          %v2354 = vunpack.c.h.b16 %v2268
          %v2355 = vunpack.c.l.b16 %v2269
          %v2356 = vunpack.c.h.b16 %v2269
          %v2357 = vunpack.c.l.b16 %v2270
          %v2358 = vunpack.c.h.b16 %v2270
          %v2359 = vunpack.c.l.b16 %v2271
          %v2360 = vunpack.c.h.b16 %v2271
          %v2361 = vunpack.c.l.b16 %v2272
          %v2362 = vunpack.c.h.b16 %v2272
          %v2363 = vunpack.c.l.b16 %v2273
          %v2364 = vunpack.c.h.b16 %v2273
          %v2365 = vunpack.c.l.b16 %v2274
          %v2366 = vunpack.c.h.b16 %v2274
          %v2367 = vunpack.c.l.b16 %v2275
          %v2368 = vunpack.c.h.b16 %v2275
          %v2369 = vunpack.c.l.b16 %v2276
          %v2370 = vunpack.c.h.b16 %v2276
          %v2371 = vunpack.c.l.b16 %v2277
          %v2372 = vunpack.c.h.b16 %v2277
          %v2373 = vunpack.c.l.b16 %v2278
          %v2374 = vunpack.c.h.b16 %v2278
          %v2375 = vunpack.c.l.b16 %v2279
          %v2376 = vunpack.c.h.b16 %v2279
          %v2377 = vunpack.c.l.b16 %v2280
          %v2378 = vunpack.c.h.b16 %v2280
          %v2379 = vunpack.c.l.b16 %v2281
          %v2380 = vunpack.c.h.b16 %v2281
          %v2381 = vunpack.c.l.b16 %v2282
          %v2382 = vunpack.c.h.b16 %v2282
          %v2383 = vunpack.c.l.b16 %v2283
          %v2384 = vunpack.c.h.b16 %v2283
          %v2385 = vunpack.c.l.b16 %v2284
          %v2386 = vunpack.c.h.b16 %v2284
          %v2387 = vunpack.c.l.b16 %v2285
          %v2388 = vunpack.c.h.b16 %v2285
          %v2389 = vunpack.c.l.b16 %v2286
          %v2390 = vunpack.c.h.b16 %v2286
          %v2391 = vunpack.c.l.b16 %v2287
          %v2392 = vunpack.c.h.b16 %v2287
          %v2393 = vunpack.c.l.b16 %v2288
          %v2394 = vunpack.c.h.b16 %v2288
          %v2395 = vunpack.c.l.b16 %v2289
          %v2396 = vunpack.c.h.b16 %v2289
          %v2397 = vunpack.c.l.b16 %v2290
          %v2398 = vunpack.c.h.b16 %v2290
          %v2399 = vpack.c.b16 %v2337, %v2335
          %v2400 = vpack.c.b16 %v2338, %v2336
          %v2401 = vpack.c.b16 %v2341, %v2339
          %v2402 = vpack.c.b16 %v2342, %v2340
          %v2403 = vpack.c.b16 %v2345, %v2343
          %v2404 = vpack.c.b16 %v2346, %v2344
          %v2405 = vpack.c.b16 %v2349, %v2347
          %v2406 = vpack.c.b16 %v2350, %v2348
          %v2407 = vpack.c.b16 %v2353, %v2351
          %v2408 = vpack.c.b16 %v2354, %v2352
          %v2409 = vpack.c.b16 %v2357, %v2355
          %v2410 = vpack.c.b16 %v2358, %v2356
          %v2411 = vpack.c.b16 %v2361, %v2359
          %v2412 = vpack.c.b16 %v2362, %v2360
          %v2413 = vpack.c.b16 %v2365, %v2363
          %v2414 = vpack.c.b16 %v2366, %v2364
          %v2415 = vpack.c.b16 %v2369, %v2367
          %v2416 = vpack.c.b16 %v2370, %v2368
          %v2417 = vpack.c.b16 %v2373, %v2371
          %v2418 = vpack.c.b16 %v2374, %v2372
          %v2419 = vpack.c.b16 %v2377, %v2375
          %v2420 = vpack.c.b16 %v2378, %v2376
          %v2421 = vpack.c.b16 %v2381, %v2379
          %v2422 = vpack.c.b16 %v2382, %v2380
          %v2423 = vpack.c.b16 %v2385, %v2383
          %v2424 = vpack.c.b16 %v2386, %v2384
          %v2425 = vpack.c.b16 %v2389, %v2387
          %v2426 = vpack.c.b16 %v2390, %v2388
          %v2427 = vpack.c.b16 %v2393, %v2391
          %v2428 = vpack.c.b16 %v2394, %v2392
          %v2429 = vpack.c.b16 %v2397, %v2395
          %v2430 = vpack.c.b16 %v2398, %v2396
          %2463 = vmatprep.subr.bf16.mxu0 %v2400
          %2464 = vmatpush1.bf16.msra.mxu0 %v2399
          %2465 = vmatprep.subr.bf16.mxu0 %v2402
          %2466 = vmatpush1.bf16.msra.mxu0 %v2401
          %2467 = vmatprep.subr.bf16.mxu0 %v2404
          %2468 = vmatpush1.bf16.msra.mxu0 %v2403
          %2469 = vmatprep.subr.bf16.mxu0 %v2406
          %2470 = vmatpush1.bf16.msra.mxu0 %v2405
          %2471 = vmatprep.subr.bf16.mxu0 %v2408
          %2472 = vmatpush1.bf16.msra.mxu0 %v2407
          %2473 = vmatprep.subr.bf16.mxu0 %v2410
          %2474 = vmatpush1.bf16.msra.mxu0 %v2409
          %2475 = vmatprep.subr.bf16.mxu0 %v2412
          %2476 = vmatpush1.bf16.msra.mxu0 %v2411
          %2477 = vmatprep.subr.bf16.mxu0 %v2414
          %2478 = vmatpush1.bf16.msra.mxu0 %v2413
          %2479 = vmatprep.subr.bf16.mxu0 %v2416
          %2480 = vmatpush1.bf16.msra.mxu0 %v2415
          %2481 = vmatprep.subr.bf16.mxu0 %v2418
          %2482 = vmatpush1.bf16.msra.mxu0 %v2417
          %2483 = vmatprep.subr.bf16.mxu0 %v2420
          %2484 = vmatpush1.bf16.msra.mxu0 %v2419
          %2485 = vmatprep.subr.bf16.mxu0 %v2422
          %2486 = vmatpush1.bf16.msra.mxu0 %v2421
          %2487 = vmatprep.subr.bf16.mxu0 %v2424
          %2488 = vmatpush1.bf16.msra.mxu0 %v2423
          %2489 = vmatprep.subr.bf16.mxu0 %v2426
          %2490 = vmatpush1.bf16.msra.mxu0 %v2425
          %2491 = vmatprep.subr.bf16.mxu0 %v2428
          %2492 = vmatpush1.bf16.msra.mxu0 %v2427
          %2493 = vmatprep.subr.bf16.mxu0 %v2430
          %2494 = vmatpush1.bf16.msra.mxu0 %v2429
          %2495 = vmatprep.mubr.bf16.mxu0 %v2244
          %2496 = vmatmul.mubr.bf16.gmra.mrb[0].mxu0 %v2243
          %v2497 = vpop.f32.mrb[0].mxu0
          %v2498 = vadd.f32 %v2296, %v2497
          %v2499 = vpop.f32.mrb[0].mxu0
          %v2500 = vadd.f32 %v2300, %v2499
          %v2501 = vpop.f32.mrb[0].mxu0
          %v2502 = vadd.f32 %v2296, %v2501
          %v2503 = vpop.f32.mrb[0].mxu0
          %v2504 = vadd.f32 %v2300, %v2503
          %2505 = vmatprep.mubr.bf16.mxu0 %v2246
          %2506 = vmatmul.mubr.bf16.gmra.mrb[0].mxu0 %v2245
          %v2507 = vpop.f32.mrb[0].mxu0
          %v2508 = vadd.f32 %v2296, %v2507
          %v2509 = vpop.f32.mrb[0].mxu0
          %v2510 = vadd.f32 %v2300, %v2509
          %v2511 = vpop.f32.mrb[0].mxu0
          %v2512 = vadd.f32 %v2296, %v2511
          %v2513 = vpop.f32.mrb[0].mxu0
          %v2514 = vadd.f32 %v2300, %v2513
          %2515 = vmatprep.mubr.bf16.mxu0 %v2248
          %2516 = vmatmul.mubr.bf16.gmra.mrb[0].mxu0 %v2247
          %v2517 = vpop.f32.mrb[0].mxu0
          %v2518 = vadd.f32 %v2296, %v2517
          %v2519 = vpop.f32.mrb[0].mxu0
          %v2520 = vadd.f32 %v2300, %v2519
          %v2521 = vpop.f32.mrb[0].mxu0
          %v2522 = vadd.f32 %v2296, %v2521
          %v2523 = vpop.f32.mrb[0].mxu0
          %v2524 = vadd.f32 %v2300, %v2523
          %2525 = vmatprep.mubr.bf16.mxu0 %v2250
          %2526 = vmatmul.mubr.bf16.gmra.mrb[0].mxu0 %v2249
          %v2527 = vpop.f32.mrb[0].mxu0
          %v2528 = vadd.f32 %v2296, %v2527
          %v2529 = vpop.f32.mrb[0].mxu0
          %v2530 = vadd.f32 %v2300, %v2529
          %v2531 = vpop.f32.mrb[0].mxu0
          %v2532 = vadd.f32 %v2296, %v2531
          %v2533 = vpop.f32.mrb[0].mxu0
          %v2534 = vadd.f32 %v2300, %v2533
          %2535 = vmatprep.mubr.bf16.mxu0 %v2252
          %2536 = vmatmul.mubr.bf16.gmra.mrb[0].mxu0 %v2251
          %v2537 = vpop.f32.mrb[0].mxu0
          %v2538 = vadd.f32 %v2296, %v2537
          %v2539 = vpop.f32.mrb[0].mxu0
          %v2540 = vadd.f32 %v2300, %v2539
          %v2541 = vpop.f32.mrb[0].mxu0
          %v2542 = vadd.f32 %v2296, %v2541
          %v2543 = vpop.f32.mrb[0].mxu0
          %v2544 = vadd.f32 %v2300, %v2543
          %2545 = vmatprep.mubr.bf16.mxu0 %v2254
          %2546 = vmatmul.mubr.bf16.gmra.mrb[0].mxu0 %v2253
          %v2547 = vpop.f32.mrb[0].mxu0
          %v2548 = vadd.f32 %v2296, %v2547
          %v2549 = vpop.f32.mrb[0].mxu0
          %v2550 = vadd.f32 %v2300, %v2549
          %v2551 = vpop.f32.mrb[0].mxu0
          %v2552 = vadd.f32 %v2296, %v2551
          %v2553 = vpop.f32.mrb[0].mxu0
          %v2554 = vadd.f32 %v2300, %v2553
          %2555 = vmatprep.mubr.bf16.mxu0 %v2256
          %2556 = vmatmul.mubr.bf16.gmra.mrb[0].mxu0 %v2255
          %v2557 = vpop.f32.mrb[0].mxu0
          %v2558 = vadd.f32 %v2296, %v2557
          %v2559 = vpop.f32.mrb[0].mxu0
          %v2560 = vadd.f32 %v2300, %v2559
          %v2561 = vpop.f32.mrb[0].mxu0
          %v2562 = vadd.f32 %v2296, %v2561
          %v2563 = vpop.f32.mrb[0].mxu0
          %v2564 = vadd.f32 %v2300, %v2563
          %2565 = vmatprep.mubr.bf16.mxu0 %v2258
          %2566 = vmatmul.mubr.bf16.gmra.mrb[0].mxu0 %v2257
          %v2567 = vpop.f32.mrb[0].mxu0
          %v2568 = vadd.f32 %v2296, %v2567
          %v2569 = vpop.f32.mrb[0].mxu0
          %v2570 = vadd.f32 %v2300, %v2569
          %v2571 = vpop.f32.mrb[0].mxu0
          %v2572 = vadd.f32 %v2296, %v2571
          %v2573 = vpop.f32.mrb[0].mxu0
          %v2574 = vadd.f32 %v2300, %v2573
          %2575 = vdwg.mxu0
          %2576 = vst [vmem:[%s487] sm:$0xff] %v2498
          %2577 = vst [vmem:[%s487 + $0x8] sm:$0xff] %v2500
          %2578 = vst [vmem:[%s487 + $0x10] sm:$0xff] %v2502
          %2579 = vst [vmem:[%s487 + $0x18] sm:$0xff] %v2504
          %2580 = vst [vmem:[%s487 + $0x20] sm:$0xff] %v2508
          %2581 = vst [vmem:[%s487 + $0x28] sm:$0xff] %v2510
          %2582 = vst [vmem:[%s487 + $0x30] sm:$0xff] %v2512
          %2583 = vst [vmem:[%s487 + $0x38] sm:$0xff] %v2514
          %2584 = vst [vmem:[%s487 + $0x40] sm:$0xff] %v2518
          %2585 = vst [vmem:[%s487 + $0x48] sm:$0xff] %v2520
          %2586 = vst [vmem:[%s487 + $0x50] sm:$0xff] %v2522
          %2587 = vst [vmem:[%s487 + $0x58] sm:$0xff] %v2524
          %2588 = vst [vmem:[%s487 + $0x60] sm:$0xff] %v2528
          %2589 = vst [vmem:[%s487 + $0x68] sm:$0xff] %v2530
          %2590 = vst [vmem:[%s487 + $0x70] sm:$0xff] %v2532
          %2591 = vst [vmem:[%s487 + $0x78] sm:$0xff] %v2534
          %2592 = vst [vmem:[%s487 + $0x80] sm:$0xff] %v2538
          %2593 = vst [vmem:[%s487 + $0x88] sm:$0xff] %v2540
          %2594 = vst [vmem:[%s487 + $0x90] sm:$0xff] %v2542
          %2595 = vst [vmem:[%s487 + $0x98] sm:$0xff] %v2544
          %2596 = vst [vmem:[%s487 + $0xa0] sm:$0xff] %v2548
          %2597 = vst [vmem:[%s487 + $0xa8] sm:$0xff] %v2550
          %2598 = vst [vmem:[%s487 + $0xb0] sm:$0xff] %v2552
          %2599 = vst [vmem:[%s487 + $0xb8] sm:$0xff] %v2554
          %2600 = vst [vmem:[%s487 + $0xc0] sm:$0xff] %v2558
          %2601 = vst [vmem:[%s487 + $0xc8] sm:$0xff] %v2560
          %2602 = vst [vmem:[%s487 + $0xd0] sm:$0xff] %v2562
          %2603 = vst [vmem:[%s487 + $0xd8] sm:$0xff] %v2564
          %2604 = vst [vmem:[%s487 + $0xe0] sm:$0xff] %v2568
          %2605 = vst [vmem:[%s487 + $0xe8] sm:$0xff] %v2570
          %2606 = vst [vmem:[%s487 + $0xf0] sm:$0xff] %v2572
          %2607 = vst [vmem:[%s487 + $0xf8] sm:$0xff] %v2574
        $region80: #{tpu_custom_call.1} parent=47 // pred_fallthru
          _
        %s2608 = sand.u32 %s229, 1
        %s2609 = scalar_lea.sflag [#allocation5], %s2608
        %s2610 = sand.u32 %s229, 1
        %s2611 = smul.addr %s2610, 256
        %s2612 = scalar_lea.vmem [#allocation14], %s2611
        // Predicated region
        $region81: #{tpu_custom_call.1} parent=47 // pred_check
          %p2613 = pneg %p239
        $region82: #{tpu_custom_call.1} parent=47 // pred_check_branch
          %2615 = sbr.rel (%p2613) target = $region84
        $region83: #{tpu_custom_call.1} parent=47 // pred_region
          %s2616 = smul.u32 16, %s34
          %s2618 = ssub.s32 4096, 4096
          %2619 = vsyncadd %s2609, %s2618
          %s2620 = smul.addr %s2616, 2
          %s2621 = smul.addr %s33, 32
          %s2622 = sadd.s32 %s2620, %s2621
          %s2623 = smul.addr %s2622, 128
          %s2624 = scalar_lea.hbm %s7, %s2623
          %s2625 = sshll.u32 %s2612, 4
          %s2626 = int_to_ptr.vmem [resolvable:$true] %s2625
          %2631 = dma.vmem_to_hbm [thread:$0]  %s2626, 4096, %s2624, %s2609, 256, 256, 16
        $region84: #{tpu_custom_call.1} parent=47 // pred_fallthru
          _
      $region48: #{tpu_custom_call.1} parent=5 // pred_fallthru
        _
      %p2632 = scmp.le.s32.totalorder 2, %s23
      // Predicated region
      $region85: #{tpu_custom_call.1} parent=5 // pred_check
        %p2633 = pneg %p2632
      $region86: #{tpu_custom_call.1} parent=5 // pred_check_branch
        %2635 = sbr.rel (%p2633) target = $region88
      $region87: #{tpu_custom_call.1} parent=5 // pred_region
        %s2636 = ssub.s32 %s23, 2
        // Predicated region
        $region89: #{tpu_custom_call.1} parent=87 // pred_check
          %p2637 = pneg %p245
        $region90: #{tpu_custom_call.1} parent=87 // pred_check_branch
          %2639 = sbr.rel (%p2637) target = $region92
        $region91: #{tpu_custom_call.1} parent=87 // pred_region
          %s2640 = sand.u32 %s230, 1
          %s2641 = scalar_lea.sflag [#allocation5], %s2640
          %s2642 = sand.u32 %s230, 1
          %s2643 = smul.addr %s2642, 256
          %s2644 = scalar_lea.vmem [#allocation14], %s2643
          %2645 = dma.done %s2641, 4096
        $region92: #{tpu_custom_call.1} parent=87 // pred_fallthru
          _
      $region88: #{tpu_custom_call.1} parent=5 // pred_fallthru
        _
    $region6: #{tpu_custom_call.1} parent=1 // loop_footer
      %s27 = sadd.s32 1, %s23
    $region7: #{tpu_custom_call.1} parent=1 // loop_footer_branch
      %22 = sbr.rel target = $region3
    $region8: #{tpu_custom_call.1} parent=1 // loop_exit
      _
    %2646 = vsyncpa [#allocation4], 1
    %s2647 = scalar_lea.sflag [#allocation4], 1
    %2648 = vsyncpa %s2647, 1
    %2649 = vsyncpa [#allocation7], 1
    %s2650 = scalar_lea.sflag [#allocation7], 1
    %2651 = vsyncpa %s2650, 1
    %2652 = vsyncpa [#allocation10], 1
    %2653 = vsyncpa [#allocation5], 1
    %s2654 = scalar_lea.sflag [#allocation5], 1
    %2655 = vsyncpa %s2654, 1

</llo_original>
